<compile_context>
chip_gen: v5e
topology: v5e:2x2
jax: 0.10.0
libtpu: 0.0.40
codegen_flags: <defaults>
</compile_context>

<pallas_src>
import math
import jax
import jax.numpy as jnp
from jax.experimental import pallas as pl
from jax.experimental.pallas import tpu as pltpu


# ---------------------------------------------------------------------------
# Fused kernel: one grid step == one image.
# ---------------------------------------------------------------------------
def _ghost_fused_kernel(x_ref, w1_ref, b1_ref, dw_ref, b2_ref, s3a_ref,
                        b3a_ref, o_ref, x1p_ref):
    # x_ref  : (1, Cin, Ho, Wo)     VMEM  strided NCHW input tile (one image)
    # w1_ref : (Cin, Cinit)         SMEM  1x1 weights, BN1 scale folded in
    # b1_ref : (Cinit,)             SMEM  BN1 shift
    # dw_ref : (9, Cinit)           SMEM  dw taps, BN2 & BN3(x2) scale folded in
    # b2_ref : (Cinit,)             SMEM  folded BN2/BN3(x2) shift
    # s3a_ref: (Cinit,)             SMEM  BN3 scale for the x1 half
    # b3a_ref: (Cinit,)             SMEM  BN3 shift for the x1 half
    # o_ref  : (1, Ho, oup*Wo)      VMEM  lane-dense output (lane = c*Wo + w)
    # x1p_ref: (Cinit, Ho+2, Wo+2)  VMEM  zero-padded x1 scratch (3x3 halo)
    _, cin, ho, wo = x_ref.shape
    cinit = x1p_ref.shape[0]
    oup = o_ref.shape[-1] // wo
    n2 = oup - cinit                      # channels taken from the cheap branch

    # Zero the halo scratch (only the 1-px border actually needs it; cheap).
    x1p_ref[...] = jnp.zeros_like(x1p_ref)

    # ---- primary 1x1 conv + BN1 as unrolled VPU FMAs (no MXU) -------------
    x1_planes = []
    for c in range(cinit):
        acc = x_ref[0, 0] * w1_ref[0, c]
        for k in range(1, cin):
            acc = acc + x_ref[0, k] * w1_ref[k, c]
        acc = acc + b1_ref[c]
        x1_planes.append(acc)                      # keep x1 in registers/VMEM
        x1p_ref[c, 1:1 + ho, 1:1 + wo] = acc       # interior of padded scratch

    out_planes = []
    # ---- x1 half of the concat: BN3 affine + ReLU --------------------------
    for c in range(cinit):
        out_planes.append(
            jnp.maximum(x1_planes[c] * s3a_ref[c] + b3a_ref[c], 0.0))

    # ---- cheap branch: depthwise 3x3 (BN2 / BN3 folded into taps) + ReLU ---
    for c in range(n2):
        xp = x1p_ref[c]                            # (Ho+2, Wo+2) padded plane
        acc = xp[0:ho, 0:wo] * dw_ref[0, c]
        for t in range(1, 9):
            di, dj = t // 3, t % 3
            acc = acc + xp[di:di + ho, dj:dj + wo] * dw_ref[t, c]
        out_planes.append(jnp.maximum(acc + b2_ref[c], 0.0))

    # Lane-dense store: (Ho, oup*Wo) slab; oup*Wo == 128 for this config.
    o_ref[0] = jnp.concatenate(out_planes, axis=-1)


# ---------------------------------------------------------------------------
# Wrapper: BN folding, layout plumbing, pallas_call.
# ---------------------------------------------------------------------------
def _fold_bn(bn, eps=1e-5):
    gamma, beta, mean, var = bn
    scale = gamma / jnp.sqrt(var + eps)
    shift = beta - mean * scale
    return scale.astype(jnp.float32), shift.astype(jnp.float32)


def conv_bn_relu_forward(x_nchw, w1, dw, bn1, bn2, bn3, out_planes, stride=1):
    """Forward pass of conv_bn_relu (has_bn=True, has_relu=True).

    x_nchw : (N, Cin, H, W) float32   -- PyTorch NCHW input
    w1     : (Cin, Cinit)             -- 1x1 primary conv weight
    dw     : (3, 3, Cinit)            -- depthwise 3x3 weight
    bn*    : tuples (gamma, beta, running_mean, running_var)
    returns: (N, out_planes, Ho, Wo) float32 in NCHW
    """
    N, Cin, H, W = x_nchw.shape
    Cinit = w1.shape[1]
    oup = out_planes
    # GhostModule config used by conv_bn_relu: kernel_size=1, ratio=2, dw_size=3.
    # Guard explicitly (correctness concern from review): the fused math below
    # assumes ratio == 2, i.e. oup == 2 * init_channels == 2 * new_channels.
    assert oup == 2 * Cinit, "fused kernel assumes GhostModule ratio == 2"
    assert dw.shape == (3, 3, Cinit)

    # stride-s 1x1 conv with padding 0 == spatial subsample.
    xs = x_nchw[:, :, ::stride, ::stride].astype(jnp.float32)  # (N,Cin,Ho,Wo)
    Ho, Wo = xs.shape[2], xs.shape[3]

    s1, sh1 = _fold_bn(bn1)                      # (Cinit,)
    s2, sh2 = _fold_bn(bn2)                      # (Cinit,)  new_channels==Cinit
    s3, sh3 = _fold_bn(bn3)                      # (oup,)

    # Fold BN1 scale into the 1x1 weights; BN2 and the x2-half of BN3 into the
    # depthwise taps. Only per-channel shifts / the x1-half affine remain.
    w1f = w1.astype(jnp.float32) * s1[None, :]                  # (Cin, Cinit)
    b1 = sh1                                                    # (Cinit,)
    s3a, b3a = s3[:Cinit], sh3[:Cinit]                          # x1 half of BN3
    s3b, sh3b = s3[Cinit:oup], sh3[Cinit:oup]                   # x2 half of BN3
    dwf = dw.astype(jnp.float32).reshape(9, Cinit) * (s2 * s3b)[None, :]
    b2f = sh2 * s3b + sh3b                                      # (Cinit,)

    smem = pl.BlockSpec(memory_space=pltpu.MemorySpace.SMEM)
    out_lanes = pl.pallas_call(
        _ghost_fused_kernel,
        out_shape=jax.ShapeDtypeStruct((N, Ho, oup * Wo), jnp.float32),
        grid=(N,),
        in_specs=[
            pl.BlockSpec((1, Cin, Ho, Wo), lambda n: (n, 0, 0, 0)),  # x
            smem,   # w1f
            smem,   # b1
            smem,   # dwf
            smem,   # b2f
            smem,   # s3a
            smem,   # b3a
        ],
        out_specs=pl.BlockSpec((1, Ho, oup * Wo), lambda n: (n, 0, 0)),
        scratch_shapes=[pltpu.VMEM((Cinit, Ho + 2, Wo + 2), jnp.float32)],
        compiler_params=pltpu.CompilerParams(
            dimension_semantics=("parallel",)),
    )(xs, w1f, b1, dwf, b2f, s3a, b3a)

    # (N, Ho, oup*Wo) with lane index c*Wo + w  ->  NCHW.
    return jnp.transpose(out_lanes.reshape(N, Ho, oup, Wo), (0, 2, 1, 3))


# ---------------------------------------------------------------------------
# Pure-JAX reference (unfused math, no Pallas) used for a sanity check.
# ---------------------------------------------------------------------------
def _reference(x_nchw, w1, dw, bn1, bn2, bn3, out_planes, stride=1):
    x = jnp.transpose(x_nchw, (0, 2, 3, 1)).astype(jnp.float32)   # NHWC
    xs = x[:, ::stride, ::stride, :]
    s1, sh1 = _fold_bn(bn1)
    s2, sh2 = _fold_bn(bn2)
    s3, sh3 = _fold_bn(bn3)
    x1 = jnp.einsum("nhwc,cd->nhwd", xs, w1) * s1 + sh1
    x1p = jnp.pad(x1, ((0, 0), (1, 1), (1, 1), (0, 0)))
    Ho, Wo = x1.shape[1], x1.shape[2]
    acc = jnp.zeros_like(x1)
    for di in range(3):
        for dj in range(3):
            acc = acc + x1p[:, di:di + Ho, dj:dj + Wo, :] * dw[di, dj]
    x2 = acc * s2 + sh2
    cat = jnp.concatenate([x1, x2], axis=-1)[..., :out_planes]
    y = jnp.maximum(cat * s3 + sh3, 0.0)
    return jnp.transpose(y, (0, 3, 1, 2))


if __name__ == "__main__":
    # Module config: conv_bn_relu(in_planes=4, out_planes=8, kernel_size=3,
    #                             stride=1, padding=1) (k/pad ignored by Ghost).
    in_planes, out_planes, stride = 4, 8, 1
    ratio = 2
    init_channels = math.ceil(out_planes / ratio)            # 4
    new_channels = init_channels * (ratio - 1)                # 4

    N, H, W = 2, 16, 16

    key = jax.random.PRNGKey(0)
    ks = jax.random.split(key, 16)

    x = jax.random.normal(ks[0], (N, in_planes, H, W), jnp.float32)

    # primary 1x1 conv weight, PyTorch (Cinit, Cin, 1, 1) -> stored (Cin, Cinit)
    w1 = jax.random.normal(ks[1], (in_planes, init_channels), jnp.float32) * 0.3
    # depthwise 3x3 weight, PyTorch (Cinit, 1, 3, 3) -> stored (3, 3, Cinit)
    dw = jax.random.normal(ks[2], (3, 3, init_channels), jnp.float32) * 0.3

    def make_bn(c, k1, k2, k3, k4):
        gamma = 0.5 + jax.random.uniform(k1, (c,), jnp.float32)
        beta = 0.1 * jax.random.normal(k2, (c,), jnp.float32)
        mean = 0.1 * jax.random.normal(k3, (c,), jnp.float32)
        var = 0.5 + jax.random.uniform(k4, (c,), jnp.float32)
        return gamma, beta, mean, var

    bn1 = make_bn(init_channels, ks[3], ks[4], ks[5], ks[6])
    bn2 = make_bn(new_channels, ks[7], ks[8], ks[9], ks[10])
    bn3 = make_bn(out_planes, ks[11], ks[12], ks[13], ks[14])

    out = conv_bn_relu_forward(x, w1, dw, bn1, bn2, bn3, out_planes, stride)
    out = jax.block_until_ready(out)

    ref = _reference(x, w1, dw, bn1, bn2, bn3, out_planes, stride)
    assert out.shape == (N, out_planes, H // stride, W // stride)
    assert jnp.max(jnp.abs(out - ref)) < 1e-4

    print("KERNEL_OK")
</pallas_src>

<mosaic_0001>
module attributes {stable_mosaic.version = 11 : i64} {
  func.func @_ghost_fused_kernel(%arg0: i32, %arg1: memref<1x4x16x16xf32, #tpu.memory_space<vmem>>, %arg2: memref<4x4xf32, #tpu.memory_space<smem>>, %arg3: memref<4xf32, #tpu.memory_space<smem>>, %arg4: memref<9x4xf32, #tpu.memory_space<smem>>, %arg5: memref<4xf32, #tpu.memory_space<smem>>, %arg6: memref<4xf32, #tpu.memory_space<smem>>, %arg7: memref<4xf32, #tpu.memory_space<smem>>, %arg8: memref<1x16x128xf32, #tpu.memory_space<vmem>>, %arg9: memref<4x18x18xf32, #tpu.memory_space<vmem>>) attributes {dimension_semantics = [#tpu.dimension_semantics<parallel>], iteration_bounds = array<i64: 2>, scalar_prefetch = 0 : i64, scratch_operands = 1 : i64, tpu.core_type = #tpu.core_type<tc>, window_params = [{transform_indices = @transform_0, window_bounds = array<i64: 1, 4, 16, 16>}, {transform_indices = @transform_1, window_bounds = array<i64: 4, 4>}, {transform_indices = @transform_2, window_bounds = array<i64: 4>}, {transform_indices = @transform_3, window_bounds = array<i64: 9, 4>}, {transform_indices = @transform_4, window_bounds = array<i64: 4>}, {transform_indices = @transform_5, window_bounds = array<i64: 4>}, {transform_indices = @transform_6, window_bounds = array<i64: 4>}, {transform_indices = @transform_7, window_bounds = array<i64: 1, 16, 128>}]} {
    %cst = arith.constant 0.000000e+00 : f32
    %0 = vector.broadcast %cst : f32 to vector<4x18x18xf32>
    %c0 = arith.constant 0 : index
    %c0_0 = arith.constant 0 : index
    %c0_1 = arith.constant 0 : index
    %1 = vector.load %arg9[%c0, %c0_0, %c0_1] : memref<4x18x18xf32, #tpu.memory_space<vmem>>, vector<4x18x18xf32>
    tpu.vector_store %arg9[%c0, %c0_0, %c0_1], %0 {strides = array<i32>} : memref<4x18x18xf32, #tpu.memory_space<vmem>>, vector<4x18x18xf32>,
    %c0_2 = arith.constant 0 : index
    %c0_3 = arith.constant 0 : index
    %c0_4 = arith.constant 0 : index
    %c0_5 = arith.constant 0 : index
    %2 = vector.load %arg1[%c0_2, %c0_3, %c0_4, %c0_5] : memref<1x4x16x16xf32, #tpu.memory_space<vmem>>, vector<1x1x16x16xf32>
    %3 = vector.shape_cast %2 : vector<1x1x16x16xf32> to vector<16x16xf32>
    %c0_6 = arith.constant 0 : index
    %c0_7 = arith.constant 0 : index
    %4 = memref.load %arg2[%c0_6, %c0_7] : memref<4x4xf32, #tpu.memory_space<smem>>
    %5 = vector.broadcast %4 : f32 to vector<16x16xf32>
    %6 = arith.mulf %3, %5 : vector<16x16xf32>
    %c0_8 = arith.constant 0 : index
    %c1 = arith.constant 1 : index
    %c0_9 = arith.constant 0 : index
    %c0_10 = arith.constant 0 : index
    %7 = vector.load %arg1[%c0_8, %c1, %c0_9, %c0_10] : memref<1x4x16x16xf32, #tpu.memory_space<vmem>>, vector<1x1x16x16xf32>
    %8 = vector.shape_cast %7 : vector<1x1x16x16xf32> to vector<16x16xf32>
    %c1_11 = arith.constant 1 : index
    %c0_12 = arith.constant 0 : index
    %9 = memref.load %arg2[%c1_11, %c0_12] : memref<4x4xf32, #tpu.memory_space<smem>>
    %10 = vector.broadcast %9 : f32 to vector<16x16xf32>
    %11 = arith.mulf %8, %10 : vector<16x16xf32>
    %12 = arith.addf %6, %11 : vector<16x16xf32>
    %c0_13 = arith.constant 0 : index
    %c2 = arith.constant 2 : index
    %c0_14 = arith.constant 0 : index
    %c0_15 = arith.constant 0 : index
    %13 = vector.load %arg1[%c0_13, %c2, %c0_14, %c0_15] : memref<1x4x16x16xf32, #tpu.memory_space<vmem>>, vector<1x1x16x16xf32>
    %14 = vector.shape_cast %13 : vector<1x1x16x16xf32> to vector<16x16xf32>
    %c2_16 = arith.constant 2 : index
    %c0_17 = arith.constant 0 : index
    %15 = memref.load %arg2[%c2_16, %c0_17] : memref<4x4xf32, #tpu.memory_space<smem>>
    %16 = vector.broadcast %15 : f32 to vector<16x16xf32>
    %17 = arith.mulf %14, %16 : vector<16x16xf32>
    %18 = arith.addf %12, %17 : vector<16x16xf32>
    %c0_18 = arith.constant 0 : index
    %c3 = arith.constant 3 : index
    %c0_19 = arith.constant 0 : index
    %c0_20 = arith.constant 0 : index
    %19 = vector.load %arg1[%c0_18, %c3, %c0_19, %c0_20] : memref<1x4x16x16xf32, #tpu.memory_space<vmem>>, vector<1x1x16x16xf32>
    %20 = vector.shape_cast %19 : vector<1x1x16x16xf32> to vector<16x16xf32>
    %c3_21 = arith.constant 3 : index
    %c0_22 = arith.constant 0 : index
    %21 = memref.load %arg2[%c3_21, %c0_22] : memref<4x4xf32, #tpu.memory_space<smem>>
    %22 = vector.broadcast %21 : f32 to vector<16x16xf32>
    %23 = arith.mulf %20, %22 : vector<16x16xf32>
    %24 = arith.addf %18, %23 : vector<16x16xf32>
    %c0_23 = arith.constant 0 : index
    %25 = memref.load %arg3[%c0_23] : memref<4xf32, #tpu.memory_space<smem>>
    %26 = vector.broadcast %25 : f32 to vector<16x16xf32>
    %27 = arith.addf %24, %26 : vector<16x16xf32>
    %c0_24 = arith.constant 0 : index
    %c1_25 = arith.constant 1 : index
    %c1_26 = arith.constant 1 : index
    %28 = vector.load %arg9[%c0_24, %c1_25, %c1_26] : memref<4x18x18xf32, #tpu.memory_space<vmem>>, vector<1x16x16xf32>
    %29 = vector.shape_cast %28 : vector<1x16x16xf32> to vector<16x16xf32>
    %30 = vector.shape_cast %27 : vector<16x16xf32> to vector<1x16x16xf32>
    tpu.vector_store %arg9[%c0_24, %c1_25, %c1_26], %30 {strides = array<i32>} : memref<4x18x18xf32, #tpu.memory_space<vmem>>, vector<1x16x16xf32>,
    %c0_27 = arith.constant 0 : index
    %c0_28 = arith.constant 0 : index
    %c0_29 = arith.constant 0 : index
    %c0_30 = arith.constant 0 : index
    %31 = vector.load %arg1[%c0_27, %c0_28, %c0_29, %c0_30] : memref<1x4x16x16xf32, #tpu.memory_space<vmem>>, vector<1x1x16x16xf32>
    %32 = vector.shape_cast %31 : vector<1x1x16x16xf32> to vector<16x16xf32>
    %c0_31 = arith.constant 0 : index
    %c1_32 = arith.constant 1 : index
    %33 = memref.load %arg2[%c0_31, %c1_32] : memref<4x4xf32, #tpu.memory_space<smem>>
    %34 = vector.broadcast %33 : f32 to vector<16x16xf32>
    %35 = arith.mulf %32, %34 : vector<16x16xf32>
    %c0_33 = arith.constant 0 : index
    %c1_34 = arith.constant 1 : index
    %c0_35 = arith.constant 0 : index
    %c0_36 = arith.constant 0 : index
    %36 = vector.load %arg1[%c0_33, %c1_34, %c0_35, %c0_36] : memref<1x4x16x16xf32, #tpu.memory_space<vmem>>, vector<1x1x16x16xf32>
    %37 = vector.shape_cast %36 : vector<1x1x16x16xf32> to vector<16x16xf32>
    %c1_37 = arith.constant 1 : index
    %c1_38 = arith.constant 1 : index
    %38 = memref.load %arg2[%c1_37, %c1_38] : memref<4x4xf32, #tpu.memory_space<smem>>
    %39 = vector.broadcast %38 : f32 to vector<16x16xf32>
    %40 = arith.mulf %37, %39 : vector<16x16xf32>
    %41 = arith.addf %35, %40 : vector<16x16xf32>
    %c0_39 = arith.constant 0 : index
    %c2_40 = arith.constant 2 : index
    %c0_41 = arith.constant 0 : index
    %c0_42 = arith.constant 0 : index
    %42 = vector.load %arg1[%c0_39, %c2_40, %c0_41, %c0_42] : memref<1x4x16x16xf32, #tpu.memory_space<vmem>>, vector<1x1x16x16xf32>
    %43 = vector.shape_cast %42 : vector<1x1x16x16xf32> to vector<16x16xf32>
    %c2_43 = arith.constant 2 : index
    %c1_44 = arith.constant 1 : index
    %44 = memref.load %arg2[%c2_43, %c1_44] : memref<4x4xf32, #tpu.memory_space<smem>>
    %45 = vector.broadcast %44 : f32 to vector<16x16xf32>
    %46 = arith.mulf %43, %45 : vector<16x16xf32>
    %47 = arith.addf %41, %46 : vector<16x16xf32>
    %c0_45 = arith.constant 0 : index
    %c3_46 = arith.constant 3 : index
    %c0_47 = arith.constant 0 : index
    %c0_48 = arith.constant 0 : index
    %48 = vector.load %arg1[%c0_45, %c3_46, %c0_47, %c0_48] : memref<1x4x16x16xf32, #tpu.memory_space<vmem>>, vector<1x1x16x16xf32>
    %49 = vector.shape_cast %48 : vector<1x1x16x16xf32> to vector<16x16xf32>
    %c3_49 = arith.constant 3 : index
    %c1_50 = arith.constant 1 : index
    %50 = memref.load %arg2[%c3_49, %c1_50] : memref<4x4xf32, #tpu.memory_space<smem>>
    %51 = vector.broadcast %50 : f32 to vector<16x16xf32>
    %52 = arith.mulf %49, %51 : vector<16x16xf32>
    %53 = arith.addf %47, %52 : vector<16x16xf32>
    %c1_51 = arith.constant 1 : index
    %54 = memref.load %arg3[%c1_51] : memref<4xf32, #tpu.memory_space<smem>>
    %55 = vector.broadcast %54 : f32 to vector<16x16xf32>
    %56 = arith.addf %53, %55 : vector<16x16xf32>
    %c1_52 = arith.constant 1 : index
    %c1_53 = arith.constant 1 : index
    %c1_54 = arith.constant 1 : index
    %57 = vector.load %arg9[%c1_52, %c1_53, %c1_54] : memref<4x18x18xf32, #tpu.memory_space<vmem>>, vector<1x16x16xf32>
    %58 = vector.shape_cast %57 : vector<1x16x16xf32> to vector<16x16xf32>
    %59 = vector.shape_cast %56 : vector<16x16xf32> to vector<1x16x16xf32>
    tpu.vector_store %arg9[%c1_52, %c1_53, %c1_54], %59 {strides = array<i32>} : memref<4x18x18xf32, #tpu.memory_space<vmem>>, vector<1x16x16xf32>,
    %c0_55 = arith.constant 0 : index
    %c0_56 = arith.constant 0 : index
    %c0_57 = arith.constant 0 : index
    %c0_58 = arith.constant 0 : index
    %60 = vector.load %arg1[%c0_55, %c0_56, %c0_57, %c0_58] : memref<1x4x16x16xf32, #tpu.memory_space<vmem>>, vector<1x1x16x16xf32>
    %61 = vector.shape_cast %60 : vector<1x1x16x16xf32> to vector<16x16xf32>
    %c0_59 = arith.constant 0 : index
    %c2_60 = arith.constant 2 : index
    %62 = memref.load %arg2[%c0_59, %c2_60] : memref<4x4xf32, #tpu.memory_space<smem>>
    %63 = vector.broadcast %62 : f32 to vector<16x16xf32>
    %64 = arith.mulf %61, %63 : vector<16x16xf32>
    %c0_61 = arith.constant 0 : index
    %c1_62 = arith.constant 1 : index
    %c0_63 = arith.constant 0 : index
    %c0_64 = arith.constant 0 : index
    %65 = vector.load %arg1[%c0_61, %c1_62, %c0_63, %c0_64] : memref<1x4x16x16xf32, #tpu.memory_space<vmem>>, vector<1x1x16x16xf32>
    %66 = vector.shape_cast %65 : vector<1x1x16x16xf32> to vector<16x16xf32>
    %c1_65 = arith.constant 1 : index
    %c2_66 = arith.constant 2 : index
    %67 = memref.load %arg2[%c1_65, %c2_66] : memref<4x4xf32, #tpu.memory_space<smem>>
    %68 = vector.broadcast %67 : f32 to vector<16x16xf32>
    %69 = arith.mulf %66, %68 : vector<16x16xf32>
    %70 = arith.addf %64, %69 : vector<16x16xf32>
    %c0_67 = arith.constant 0 : index
    %c2_68 = arith.constant 2 : index
    %c0_69 = arith.constant 0 : index
    %c0_70 = arith.constant 0 : index
    %71 = vector.load %arg1[%c0_67, %c2_68, %c0_69, %c0_70] : memref<1x4x16x16xf32, #tpu.memory_space<vmem>>, vector<1x1x16x16xf32>
    %72 = vector.shape_cast %71 : vector<1x1x16x16xf32> to vector<16x16xf32>
    %c2_71 = arith.constant 2 : index
    %c2_72 = arith.constant 2 : index
    %73 = memref.load %arg2[%c2_71, %c2_72] : memref<4x4xf32, #tpu.memory_space<smem>>
    %74 = vector.broadcast %73 : f32 to vector<16x16xf32>
    %75 = arith.mulf %72, %74 : vector<16x16xf32>
    %76 = arith.addf %70, %75 : vector<16x16xf32>
    %c0_73 = arith.constant 0 : index
    %c3_74 = arith.constant 3 : index
    %c0_75 = arith.constant 0 : index
    %c0_76 = arith.constant 0 : index
    %77 = vector.load %arg1[%c0_73, %c3_74, %c0_75, %c0_76] : memref<1x4x16x16xf32, #tpu.memory_space<vmem>>, vector<1x1x16x16xf32>
    %78 = vector.shape_cast %77 : vector<1x1x16x16xf32> to vector<16x16xf32>
    %c3_77 = arith.constant 3 : index
    %c2_78 = arith.constant 2 : index
    %79 = memref.load %arg2[%c3_77, %c2_78] : memref<4x4xf32, #tpu.memory_space<smem>>
    %80 = vector.broadcast %79 : f32 to vector<16x16xf32>
    %81 = arith.mulf %78, %80 : vector<16x16xf32>
    %82 = arith.addf %76, %81 : vector<16x16xf32>
    %c2_79 = arith.constant 2 : index
    %83 = memref.load %arg3[%c2_79] : memref<4xf32, #tpu.memory_space<smem>>
    %84 = vector.broadcast %83 : f32 to vector<16x16xf32>
    %85 = arith.addf %82, %84 : vector<16x16xf32>
    %c2_80 = arith.constant 2 : index
    %c1_81 = arith.constant 1 : index
    %c1_82 = arith.constant 1 : index
    %86 = vector.load %arg9[%c2_80, %c1_81, %c1_82] : memref<4x18x18xf32, #tpu.memory_space<vmem>>, vector<1x16x16xf32>
    %87 = vector.shape_cast %86 : vector<1x16x16xf32> to vector<16x16xf32>
    %88 = vector.shape_cast %85 : vector<16x16xf32> to vector<1x16x16xf32>
    tpu.vector_store %arg9[%c2_80, %c1_81, %c1_82], %88 {strides = array<i32>} : memref<4x18x18xf32, #tpu.memory_space<vmem>>, vector<1x16x16xf32>,
    %c0_83 = arith.constant 0 : index
    %c0_84 = arith.constant 0 : index
    %c0_85 = arith.constant 0 : index
    %c0_86 = arith.constant 0 : index
    %89 = vector.load %arg1[%c0_83, %c0_84, %c0_85, %c0_86] : memref<1x4x16x16xf32, #tpu.memory_space<vmem>>, vector<1x1x16x16xf32>
    %90 = vector.shape_cast %89 : vector<1x1x16x16xf32> to vector<16x16xf32>
    %c0_87 = arith.constant 0 : index
    %c3_88 = arith.constant 3 : index
    %91 = memref.load %arg2[%c0_87, %c3_88] : memref<4x4xf32, #tpu.memory_space<smem>>
    %92 = vector.broadcast %91 : f32 to vector<16x16xf32>
    %93 = arith.mulf %90, %92 : vector<16x16xf32>
    %c0_89 = arith.constant 0 : index
    %c1_90 = arith.constant 1 : index
    %c0_91 = arith.constant 0 : index
    %c0_92 = arith.constant 0 : index
    %94 = vector.load %arg1[%c0_89, %c1_90, %c0_91, %c0_92] : memref<1x4x16x16xf32, #tpu.memory_space<vmem>>, vector<1x1x16x16xf32>
    %95 = vector.shape_cast %94 : vector<1x1x16x16xf32> to vector<16x16xf32>
    %c1_93 = arith.constant 1 : index
    %c3_94 = arith.constant 3 : index
    %96 = memref.load %arg2[%c1_93, %c3_94] : memref<4x4xf32, #tpu.memory_space<smem>>
    %97 = vector.broadcast %96 : f32 to vector<16x16xf32>
    %98 = arith.mulf %95, %97 : vector<16x16xf32>
    %99 = arith.addf %93, %98 : vector<16x16xf32>
    %c0_95 = arith.constant 0 : index
    %c2_96 = arith.constant 2 : index
    %c0_97 = arith.constant 0 : index
    %c0_98 = arith.constant 0 : index
    %100 = vector.load %arg1[%c0_95, %c2_96, %c0_97, %c0_98] : memref<1x4x16x16xf32, #tpu.memory_space<vmem>>, vector<1x1x16x16xf32>
    %101 = vector.shape_cast %100 : vector<1x1x16x16xf32> to vector<16x16xf32>
    %c2_99 = arith.constant 2 : index
    %c3_100 = arith.constant 3 : index
    %102 = memref.load %arg2[%c2_99, %c3_100] : memref<4x4xf32, #tpu.memory_space<smem>>
    %103 = vector.broadcast %102 : f32 to vector<16x16xf32>
    %104 = arith.mulf %101, %103 : vector<16x16xf32>
    %105 = arith.addf %99, %104 : vector<16x16xf32>
    %c0_101 = arith.constant 0 : index
    %c3_102 = arith.constant 3 : index
    %c0_103 = arith.constant 0 : index
    %c0_104 = arith.constant 0 : index
    %106 = vector.load %arg1[%c0_101, %c3_102, %c0_103, %c0_104] : memref<1x4x16x16xf32, #tpu.memory_space<vmem>>, vector<1x1x16x16xf32>
    %107 = vector.shape_cast %106 : vector<1x1x16x16xf32> to vector<16x16xf32>
    %c3_105 = arith.constant 3 : index
    %c3_106 = arith.constant 3 : index
    %108 = memref.load %arg2[%c3_105, %c3_106] : memref<4x4xf32, #tpu.memory_space<smem>>
    %109 = vector.broadcast %108 : f32 to vector<16x16xf32>
    %110 = arith.mulf %107, %109 : vector<16x16xf32>
    %111 = arith.addf %105, %110 : vector<16x16xf32>
    %c3_107 = arith.constant 3 : index
    %112 = memref.load %arg3[%c3_107] : memref<4xf32, #tpu.memory_space<smem>>
    %113 = vector.broadcast %112 : f32 to vector<16x16xf32>
    %114 = arith.addf %111, %113 : vector<16x16xf32>
    %c3_108 = arith.constant 3 : index
    %c1_109 = arith.constant 1 : index
    %c1_110 = arith.constant 1 : index
    %115 = vector.load %arg9[%c3_108, %c1_109, %c1_110] : memref<4x18x18xf32, #tpu.memory_space<vmem>>, vector<1x16x16xf32>
    %116 = vector.shape_cast %115 : vector<1x16x16xf32> to vector<16x16xf32>
    %117 = vector.shape_cast %114 : vector<16x16xf32> to vector<1x16x16xf32>
    tpu.vector_store %arg9[%c3_108, %c1_109, %c1_110], %117 {strides = array<i32>} : memref<4x18x18xf32, #tpu.memory_space<vmem>>, vector<1x16x16xf32>,
    %c0_111 = arith.constant 0 : index
    %118 = memref.load %arg6[%c0_111] : memref<4xf32, #tpu.memory_space<smem>>
    %119 = vector.broadcast %118 : f32 to vector<16x16xf32>
    %120 = arith.mulf %27, %119 : vector<16x16xf32>
    %c0_112 = arith.constant 0 : index
    %121 = memref.load %arg7[%c0_112] : memref<4xf32, #tpu.memory_space<smem>>
    %122 = vector.broadcast %121 : f32 to vector<16x16xf32>
    %123 = arith.addf %120, %122 : vector<16x16xf32>
    %cst_113 = arith.constant 0.000000e+00 : f32
    %124 = vector.broadcast %cst_113 : f32 to vector<16x16xf32>
    %125 = arith.maximumf %123, %124 : vector<16x16xf32>
    %c1_114 = arith.constant 1 : index
    %126 = memref.load %arg6[%c1_114] : memref<4xf32, #tpu.memory_space<smem>>
    %127 = vector.broadcast %126 : f32 to vector<16x16xf32>
    %128 = arith.mulf %56, %127 : vector<16x16xf32>
    %c1_115 = arith.constant 1 : index
    %129 = memref.load %arg7[%c1_115] : memref<4xf32, #tpu.memory_space<smem>>
    %130 = vector.broadcast %129 : f32 to vector<16x16xf32>
    %131 = arith.addf %128, %130 : vector<16x16xf32>
    %cst_116 = arith.constant 0.000000e+00 : f32
    %132 = vector.broadcast %cst_116 : f32 to vector<16x16xf32>
    %133 = arith.maximumf %131, %132 : vector<16x16xf32>
    %c2_117 = arith.constant 2 : index
    %134 = memref.load %arg6[%c2_117] : memref<4xf32, #tpu.memory_space<smem>>
    %135 = vector.broadcast %134 : f32 to vector<16x16xf32>
    %136 = arith.mulf %85, %135 : vector<16x16xf32>
    %c2_118 = arith.constant 2 : index
    %137 = memref.load %arg7[%c2_118] : memref<4xf32, #tpu.memory_space<smem>>
    %138 = vector.broadcast %137 : f32 to vector<16x16xf32>
    %139 = arith.addf %136, %138 : vector<16x16xf32>
    %cst_119 = arith.constant 0.000000e+00 : f32
    %140 = vector.broadcast %cst_119 : f32 to vector<16x16xf32>
    %141 = arith.maximumf %139, %140 : vector<16x16xf32>
    %c3_120 = arith.constant 3 : index
    %142 = memref.load %arg6[%c3_120] : memref<4xf32, #tpu.memory_space<smem>>
    %143 = vector.broadcast %142 : f32 to vector<16x16xf32>
    %144 = arith.mulf %114, %143 : vector<16x16xf32>
    %c3_121 = arith.constant 3 : index
    %145 = memref.load %arg7[%c3_121] : memref<4xf32, #tpu.memory_space<smem>>
    %146 = vector.broadcast %145 : f32 to vector<16x16xf32>
    %147 = arith.addf %144, %146 : vector<16x16xf32>
    %cst_122 = arith.constant 0.000000e+00 : f32
    %148 = vector.broadcast %cst_122 : f32 to vector<16x16xf32>
    %149 = arith.maximumf %147, %148 : vector<16x16xf32>
    %c0_123 = arith.constant 0 : index
    %c0_124 = arith.constant 0 : index
    %c0_125 = arith.constant 0 : index
    %150 = vector.load %arg9[%c0_123, %c0_124, %c0_125] : memref<4x18x18xf32, #tpu.memory_space<vmem>>, vector<1x18x18xf32>
    %151 = vector.shape_cast %150 : vector<1x18x18xf32> to vector<18x18xf32>
    %152 = vector.extract_strided_slice %151 {offsets = [0, 0], sizes = [16, 16], strides = [1, 1]} : vector<18x18xf32> to vector<16x16xf32>
    %c0_126 = arith.constant 0 : index
    %c0_127 = arith.constant 0 : index
    %153 = memref.load %arg4[%c0_126, %c0_127] : memref<9x4xf32, #tpu.memory_space<smem>>
    %154 = vector.broadcast %153 : f32 to vector<16x16xf32>
    %155 = arith.mulf %152, %154 : vector<16x16xf32>
    %156 = vector.extract_strided_slice %151 {offsets = [0, 1], sizes = [16, 16], strides = [1, 1]} : vector<18x18xf32> to vector<16x16xf32>
    %c1_128 = arith.constant 1 : index
    %c0_129 = arith.constant 0 : index
    %157 = memref.load %arg4[%c1_128, %c0_129] : memref<9x4xf32, #tpu.memory_space<smem>>
    %158 = vector.broadcast %157 : f32 to vector<16x16xf32>
    %159 = arith.mulf %156, %158 : vector<16x16xf32>
    %160 = arith.addf %155, %159 : vector<16x16xf32>
    %161 = vector.extract_strided_slice %151 {offsets = [0, 2], sizes = [16, 16], strides = [1, 1]} : vector<18x18xf32> to vector<16x16xf32>
    %c2_130 = arith.constant 2 : index
    %c0_131 = arith.constant 0 : index
    %162 = memref.load %arg4[%c2_130, %c0_131] : memref<9x4xf32, #tpu.memory_space<smem>>
    %163 = vector.broadcast %162 : f32 to vector<16x16xf32>
    %164 = arith.mulf %161, %163 : vector<16x16xf32>
    %165 = arith.addf %160, %164 : vector<16x16xf32>
    %166 = vector.extract_strided_slice %151 {offsets = [1, 0], sizes = [16, 16], strides = [1, 1]} : vector<18x18xf32> to vector<16x16xf32>
    %c3_132 = arith.constant 3 : index
    %c0_133 = arith.constant 0 : index
    %167 = memref.load %arg4[%c3_132, %c0_133] : memref<9x4xf32, #tpu.memory_space<smem>>
    %168 = vector.broadcast %167 : f32 to vector<16x16xf32>
    %169 = arith.mulf %166, %168 : vector<16x16xf32>
    %170 = arith.addf %165, %169 : vector<16x16xf32>
    %171 = vector.extract_strided_slice %151 {offsets = [1, 1], sizes = [16, 16], strides = [1, 1]} : vector<18x18xf32> to vector<16x16xf32>
    %c4 = arith.constant 4 : index
    %c0_134 = arith.constant 0 : index
    %172 = memref.load %arg4[%c4, %c0_134] : memref<9x4xf32, #tpu.memory_space<smem>>
    %173 = vector.broadcast %172 : f32 to vector<16x16xf32>
    %174 = arith.mulf %171, %173 : vector<16x16xf32>
    %175 = arith.addf %170, %174 : vector<16x16xf32>
    %176 = vector.extract_strided_slice %151 {offsets = [1, 2], sizes = [16, 16], strides = [1, 1]} : vector<18x18xf32> to vector<16x16xf32>
    %c5 = arith.constant 5 : index
    %c0_135 = arith.constant 0 : index
    %177 = memref.load %arg4[%c5, %c0_135] : memref<9x4xf32, #tpu.memory_space<smem>>
    %178 = vector.broadcast %177 : f32 to vector<16x16xf32>
    %179 = arith.mulf %176, %178 : vector<16x16xf32>
    %180 = arith.addf %175, %179 : vector<16x16xf32>
    %181 = vector.extract_strided_slice %151 {offsets = [2, 0], sizes = [16, 16], strides = [1, 1]} : vector<18x18xf32> to vector<16x16xf32>
    %c6 = arith.constant 6 : index
    %c0_136 = arith.constant 0 : index
    %182 = memref.load %arg4[%c6, %c0_136] : memref<9x4xf32, #tpu.memory_space<smem>>
    %183 = vector.broadcast %182 : f32 to vector<16x16xf32>
    %184 = arith.mulf %181, %183 : vector<16x16xf32>
    %185 = arith.addf %180, %184 : vector<16x16xf32>
    %186 = vector.extract_strided_slice %151 {offsets = [2, 1], sizes = [16, 16], strides = [1, 1]} : vector<18x18xf32> to vector<16x16xf32>
    %c7 = arith.constant 7 : index
    %c0_137 = arith.constant 0 : index
    %187 = memref.load %arg4[%c7, %c0_137] : memref<9x4xf32, #tpu.memory_space<smem>>
    %188 = vector.broadcast %187 : f32 to vector<16x16xf32>
    %189 = arith.mulf %186, %188 : vector<16x16xf32>
    %190 = arith.addf %185, %189 : vector<16x16xf32>
    %191 = vector.extract_strided_slice %151 {offsets = [2, 2], sizes = [16, 16], strides = [1, 1]} : vector<18x18xf32> to vector<16x16xf32>
    %c8 = arith.constant 8 : index
    %c0_138 = arith.constant 0 : index
    %192 = memref.load %arg4[%c8, %c0_138] : memref<9x4xf32, #tpu.memory_space<smem>>
    %193 = vector.broadcast %192 : f32 to vector<16x16xf32>
    %194 = arith.mulf %191, %193 : vector<16x16xf32>
    %195 = arith.addf %190, %194 : vector<16x16xf32>
    %c0_139 = arith.constant 0 : index
    %196 = memref.load %arg5[%c0_139] : memref<4xf32, #tpu.memory_space<smem>>
    %197 = vector.broadcast %196 : f32 to vector<16x16xf32>
    %198 = arith.addf %195, %197 : vector<16x16xf32>
    %cst_140 = arith.constant 0.000000e+00 : f32
    %199 = vector.broadcast %cst_140 : f32 to vector<16x16xf32>
    %200 = arith.maximumf %198, %199 : vector<16x16xf32>
    %c1_141 = arith.constant 1 : index
    %c0_142 = arith.constant 0 : index
    %c0_143 = arith.constant 0 : index
    %201 = vector.load %arg9[%c1_141, %c0_142, %c0_143] : memref<4x18x18xf32, #tpu.memory_space<vmem>>, vector<1x18x18xf32>
    %202 = vector.shape_cast %201 : vector<1x18x18xf32> to vector<18x18xf32>
    %203 = vector.extract_strided_slice %202 {offsets = [0, 0], sizes = [16, 16], strides = [1, 1]} : vector<18x18xf32> to vector<16x16xf32>
    %c0_144 = arith.constant 0 : index
    %c1_145 = arith.constant 1 : index
    %204 = memref.load %arg4[%c0_144, %c1_145] : memref<9x4xf32, #tpu.memory_space<smem>>
    %205 = vector.broadcast %204 : f32 to vector<16x16xf32>
    %206 = arith.mulf %203, %205 : vector<16x16xf32>
    %207 = vector.extract_strided_slice %202 {offsets = [0, 1], sizes = [16, 16], strides = [1, 1]} : vector<18x18xf32> to vector<16x16xf32>
    %c1_146 = arith.constant 1 : index
    %c1_147 = arith.constant 1 : index
    %208 = memref.load %arg4[%c1_146, %c1_147] : memref<9x4xf32, #tpu.memory_space<smem>>
    %209 = vector.broadcast %208 : f32 to vector<16x16xf32>
    %210 = arith.mulf %207, %209 : vector<16x16xf32>
    %211 = arith.addf %206, %210 : vector<16x16xf32>
    %212 = vector.extract_strided_slice %202 {offsets = [0, 2], sizes = [16, 16], strides = [1, 1]} : vector<18x18xf32> to vector<16x16xf32>
    %c2_148 = arith.constant 2 : index
    %c1_149 = arith.constant 1 : index
    %213 = memref.load %arg4[%c2_148, %c1_149] : memref<9x4xf32, #tpu.memory_space<smem>>
    %214 = vector.broadcast %213 : f32 to vector<16x16xf32>
    %215 = arith.mulf %212, %214 : vector<16x16xf32>
    %216 = arith.addf %211, %215 : vector<16x16xf32>
    %217 = vector.extract_strided_slice %202 {offsets = [1, 0], sizes = [16, 16], strides = [1, 1]} : vector<18x18xf32> to vector<16x16xf32>
    %c3_150 = arith.constant 3 : index
    %c1_151 = arith.constant 1 : index
    %218 = memref.load %arg4[%c3_150, %c1_151] : memref<9x4xf32, #tpu.memory_space<smem>>
    %219 = vector.broadcast %218 : f32 to vector<16x16xf32>
    %220 = arith.mulf %217, %219 : vector<16x16xf32>
    %221 = arith.addf %216, %220 : vector<16x16xf32>
    %222 = vector.extract_strided_slice %202 {offsets = [1, 1], sizes = [16, 16], strides = [1, 1]} : vector<18x18xf32> to vector<16x16xf32>
    %c4_152 = arith.constant 4 : index
    %c1_153 = arith.constant 1 : index
    %223 = memref.load %arg4[%c4_152, %c1_153] : memref<9x4xf32, #tpu.memory_space<smem>>
    %224 = vector.broadcast %223 : f32 to vector<16x16xf32>
    %225 = arith.mulf %222, %224 : vector<16x16xf32>
    %226 = arith.addf %221, %225 : vector<16x16xf32>
    %227 = vector.extract_strided_slice %202 {offsets = [1, 2], sizes = [16, 16], strides = [1, 1]} : vector<18x18xf32> to vector<16x16xf32>
    %c5_154 = arith.constant 5 : index
    %c1_155 = arith.constant 1 : index
    %228 = memref.load %arg4[%c5_154, %c1_155] : memref<9x4xf32, #tpu.memory_space<smem>>
    %229 = vector.broadcast %228 : f32 to vector<16x16xf32>
    %230 = arith.mulf %227, %229 : vector<16x16xf32>
    %231 = arith.addf %226, %230 : vector<16x16xf32>
    %232 = vector.extract_strided_slice %202 {offsets = [2, 0], sizes = [16, 16], strides = [1, 1]} : vector<18x18xf32> to vector<16x16xf32>
    %c6_156 = arith.constant 6 : index
    %c1_157 = arith.constant 1 : index
    %233 = memref.load %arg4[%c6_156, %c1_157] : memref<9x4xf32, #tpu.memory_space<smem>>
    %234 = vector.broadcast %233 : f32 to vector<16x16xf32>
    %235 = arith.mulf %232, %234 : vector<16x16xf32>
    %236 = arith.addf %231, %235 : vector<16x16xf32>
    %237 = vector.extract_strided_slice %202 {offsets = [2, 1], sizes = [16, 16], strides = [1, 1]} : vector<18x18xf32> to vector<16x16xf32>
    %c7_158 = arith.constant 7 : index
    %c1_159 = arith.constant 1 : index
    %238 = memref.load %arg4[%c7_158, %c1_159] : memref<9x4xf32, #tpu.memory_space<smem>>
    %239 = vector.broadcast %238 : f32 to vector<16x16xf32>
    %240 = arith.mulf %237, %239 : vector<16x16xf32>
    %241 = arith.addf %236, %240 : vector<16x16xf32>
    %242 = vector.extract_strided_slice %202 {offsets = [2, 2], sizes = [16, 16], strides = [1, 1]} : vector<18x18xf32> to vector<16x16xf32>
    %c8_160 = arith.constant 8 : index
    %c1_161 = arith.constant 1 : index
    %243 = memref.load %arg4[%c8_160, %c1_161] : memref<9x4xf32, #tpu.memory_space<smem>>
    %244 = vector.broadcast %243 : f32 to vector<16x16xf32>
    %245 = arith.mulf %242, %244 : vector<16x16xf32>
    %246 = arith.addf %241, %245 : vector<16x16xf32>
    %c1_162 = arith.constant 1 : index
    %247 = memref.load %arg5[%c1_162] : memref<4xf32, #tpu.memory_space<smem>>
    %248 = vector.broadcast %247 : f32 to vector<16x16xf32>
    %249 = arith.addf %246, %248 : vector<16x16xf32>
    %cst_163 = arith.constant 0.000000e+00 : f32
    %250 = vector.broadcast %cst_163 : f32 to vector<16x16xf32>
    %251 = arith.maximumf %249, %250 : vector<16x16xf32>
    %c2_164 = arith.constant 2 : index
    %c0_165 = arith.constant 0 : index
    %c0_166 = arith.constant 0 : index
    %252 = vector.load %arg9[%c2_164, %c0_165, %c0_166] : memref<4x18x18xf32, #tpu.memory_space<vmem>>, vector<1x18x18xf32>
    %253 = vector.shape_cast %252 : vector<1x18x18xf32> to vector<18x18xf32>
    %254 = vector.extract_strided_slice %253 {offsets = [0, 0], sizes = [16, 16], strides = [1, 1]} : vector<18x18xf32> to vector<16x16xf32>
    %c0_167 = arith.constant 0 : index
    %c2_168 = arith.constant 2 : index
    %255 = memref.load %arg4[%c0_167, %c2_168] : memref<9x4xf32, #tpu.memory_space<smem>>
    %256 = vector.broadcast %255 : f32 to vector<16x16xf32>
    %257 = arith.mulf %254, %256 : vector<16x16xf32>
    %258 = vector.extract_strided_slice %253 {offsets = [0, 1], sizes = [16, 16], strides = [1, 1]} : vector<18x18xf32> to vector<16x16xf32>
    %c1_169 = arith.constant 1 : index
    %c2_170 = arith.constant 2 : index
    %259 = memref.load %arg4[%c1_169, %c2_170] : memref<9x4xf32, #tpu.memory_space<smem>>
    %260 = vector.broadcast %259 : f32 to vector<16x16xf32>
    %261 = arith.mulf %258, %260 : vector<16x16xf32>
    %262 = arith.addf %257, %261 : vector<16x16xf32>
    %263 = vector.extract_strided_slice %253 {offsets = [0, 2], sizes = [16, 16], strides = [1, 1]} : vector<18x18xf32> to vector<16x16xf32>
    %c2_171 = arith.constant 2 : index
    %c2_172 = arith.constant 2 : index
    %264 = memref.load %arg4[%c2_171, %c2_172] : memref<9x4xf32, #tpu.memory_space<smem>>
    %265 = vector.broadcast %264 : f32 to vector<16x16xf32>
    %266 = arith.mulf %263, %265 : vector<16x16xf32>
    %267 = arith.addf %262, %266 : vector<16x16xf32>
    %268 = vector.extract_strided_slice %253 {offsets = [1, 0], sizes = [16, 16], strides = [1, 1]} : vector<18x18xf32> to vector<16x16xf32>
    %c3_173 = arith.constant 3 : index
    %c2_174 = arith.constant 2 : index
    %269 = memref.load %arg4[%c3_173, %c2_174] : memref<9x4xf32, #tpu.memory_space<smem>>
    %270 = vector.broadcast %269 : f32 to vector<16x16xf32>
    %271 = arith.mulf %268, %270 : vector<16x16xf32>
    %272 = arith.addf %267, %271 : vector<16x16xf32>
    %273 = vector.extract_strided_slice %253 {offsets = [1, 1], sizes = [16, 16], strides = [1, 1]} : vector<18x18xf32> to vector<16x16xf32>
    %c4_175 = arith.constant 4 : index
    %c2_176 = arith.constant 2 : index
    %274 = memref.load %arg4[%c4_175, %c2_176] : memref<9x4xf32, #tpu.memory_space<smem>>
    %275 = vector.broadcast %274 : f32 to vector<16x16xf32>
    %276 = arith.mulf %273, %275 : vector<16x16xf32>
    %277 = arith.addf %272, %276 : vector<16x16xf32>
    %278 = vector.extract_strided_slice %253 {offsets = [1, 2], sizes = [16, 16], strides = [1, 1]} : vector<18x18xf32> to vector<16x16xf32>
    %c5_177 = arith.constant 5 : index
    %c2_178 = arith.constant 2 : index
    %279 = memref.load %arg4[%c5_177, %c2_178] : memref<9x4xf32, #tpu.memory_space<smem>>
    %280 = vector.broadcast %279 : f32 to vector<16x16xf32>
    %281 = arith.mulf %278, %280 : vector<16x16xf32>
    %282 = arith.addf %277, %281 : vector<16x16xf32>
    %283 = vector.extract_strided_slice %253 {offsets = [2, 0], sizes = [16, 16], strides = [1, 1]} : vector<18x18xf32> to vector<16x16xf32>
    %c6_179 = arith.constant 6 : index
    %c2_180 = arith.constant 2 : index
    %284 = memref.load %arg4[%c6_179, %c2_180] : memref<9x4xf32, #tpu.memory_space<smem>>
    %285 = vector.broadcast %284 : f32 to vector<16x16xf32>
    %286 = arith.mulf %283, %285 : vector<16x16xf32>
    %287 = arith.addf %282, %286 : vector<16x16xf32>
    %288 = vector.extract_strided_slice %253 {offsets = [2, 1], sizes = [16, 16], strides = [1, 1]} : vector<18x18xf32> to vector<16x16xf32>
    %c7_181 = arith.constant 7 : index
    %c2_182 = arith.constant 2 : index
    %289 = memref.load %arg4[%c7_181, %c2_182] : memref<9x4xf32, #tpu.memory_space<smem>>
    %290 = vector.broadcast %289 : f32 to vector<16x16xf32>
    %291 = arith.mulf %288, %290 : vector<16x16xf32>
    %292 = arith.addf %287, %291 : vector<16x16xf32>
    %293 = vector.extract_strided_slice %253 {offsets = [2, 2], sizes = [16, 16], strides = [1, 1]} : vector<18x18xf32> to vector<16x16xf32>
    %c8_183 = arith.constant 8 : index
    %c2_184 = arith.constant 2 : index
    %294 = memref.load %arg4[%c8_183, %c2_184] : memref<9x4xf32, #tpu.memory_space<smem>>
    %295 = vector.broadcast %294 : f32 to vector<16x16xf32>
    %296 = arith.mulf %293, %295 : vector<16x16xf32>
    %297 = arith.addf %292, %296 : vector<16x16xf32>
    %c2_185 = arith.constant 2 : index
    %298 = memref.load %arg5[%c2_185] : memref<4xf32, #tpu.memory_space<smem>>
    %299 = vector.broadcast %298 : f32 to vector<16x16xf32>
    %300 = arith.addf %297, %299 : vector<16x16xf32>
    %cst_186 = arith.constant 0.000000e+00 : f32
    %301 = vector.broadcast %cst_186 : f32 to vector<16x16xf32>
    %302 = arith.maximumf %300, %301 : vector<16x16xf32>
    %c3_187 = arith.constant 3 : index
    %c0_188 = arith.constant 0 : index
    %c0_189 = arith.constant 0 : index
    %303 = vector.load %arg9[%c3_187, %c0_188, %c0_189] : memref<4x18x18xf32, #tpu.memory_space<vmem>>, vector<1x18x18xf32>
    %304 = vector.shape_cast %303 : vector<1x18x18xf32> to vector<18x18xf32>
    %305 = vector.extract_strided_slice %304 {offsets = [0, 0], sizes = [16, 16], strides = [1, 1]} : vector<18x18xf32> to vector<16x16xf32>
    %c0_190 = arith.constant 0 : index
    %c3_191 = arith.constant 3 : index
    %306 = memref.load %arg4[%c0_190, %c3_191] : memref<9x4xf32, #tpu.memory_space<smem>>
    %307 = vector.broadcast %306 : f32 to vector<16x16xf32>
    %308 = arith.mulf %305, %307 : vector<16x16xf32>
    %309 = vector.extract_strided_slice %304 {offsets = [0, 1], sizes = [16, 16], strides = [1, 1]} : vector<18x18xf32> to vector<16x16xf32>
    %c1_192 = arith.constant 1 : index
    %c3_193 = arith.constant 3 : index
    %310 = memref.load %arg4[%c1_192, %c3_193] : memref<9x4xf32, #tpu.memory_space<smem>>
    %311 = vector.broadcast %310 : f32 to vector<16x16xf32>
    %312 = arith.mulf %309, %311 : vector<16x16xf32>
    %313 = arith.addf %308, %312 : vector<16x16xf32>
    %314 = vector.extract_strided_slice %304 {offsets = [0, 2], sizes = [16, 16], strides = [1, 1]} : vector<18x18xf32> to vector<16x16xf32>
    %c2_194 = arith.constant 2 : index
    %c3_195 = arith.constant 3 : index
    %315 = memref.load %arg4[%c2_194, %c3_195] : memref<9x4xf32, #tpu.memory_space<smem>>
    %316 = vector.broadcast %315 : f32 to vector<16x16xf32>
    %317 = arith.mulf %314, %316 : vector<16x16xf32>
    %318 = arith.addf %313, %317 : vector<16x16xf32>
    %319 = vector.extract_strided_slice %304 {offsets = [1, 0], sizes = [16, 16], strides = [1, 1]} : vector<18x18xf32> to vector<16x16xf32>
    %c3_196 = arith.constant 3 : index
    %c3_197 = arith.constant 3 : index
    %320 = memref.load %arg4[%c3_196, %c3_197] : memref<9x4xf32, #tpu.memory_space<smem>>
    %321 = vector.broadcast %320 : f32 to vector<16x16xf32>
    %322 = arith.mulf %319, %321 : vector<16x16xf32>
    %323 = arith.addf %318, %322 : vector<16x16xf32>
    %324 = vector.extract_strided_slice %304 {offsets = [1, 1], sizes = [16, 16], strides = [1, 1]} : vector<18x18xf32> to vector<16x16xf32>
    %c4_198 = arith.constant 4 : index
    %c3_199 = arith.constant 3 : index
    %325 = memref.load %arg4[%c4_198, %c3_199] : memref<9x4xf32, #tpu.memory_space<smem>>
    %326 = vector.broadcast %325 : f32 to vector<16x16xf32>
    %327 = arith.mulf %324, %326 : vector<16x16xf32>
    %328 = arith.addf %323, %327 : vector<16x16xf32>
    %329 = vector.extract_strided_slice %304 {offsets = [1, 2], sizes = [16, 16], strides = [1, 1]} : vector<18x18xf32> to vector<16x16xf32>
    %c5_200 = arith.constant 5 : index
    %c3_201 = arith.constant 3 : index
    %330 = memref.load %arg4[%c5_200, %c3_201] : memref<9x4xf32, #tpu.memory_space<smem>>
    %331 = vector.broadcast %330 : f32 to vector<16x16xf32>
    %332 = arith.mulf %329, %331 : vector<16x16xf32>
    %333 = arith.addf %328, %332 : vector<16x16xf32>
    %334 = vector.extract_strided_slice %304 {offsets = [2, 0], sizes = [16, 16], strides = [1, 1]} : vector<18x18xf32> to vector<16x16xf32>
    %c6_202 = arith.constant 6 : index
    %c3_203 = arith.constant 3 : index
    %335 = memref.load %arg4[%c6_202, %c3_203] : memref<9x4xf32, #tpu.memory_space<smem>>
    %336 = vector.broadcast %335 : f32 to vector<16x16xf32>
    %337 = arith.mulf %334, %336 : vector<16x16xf32>
    %338 = arith.addf %333, %337 : vector<16x16xf32>
    %339 = vector.extract_strided_slice %304 {offsets = [2, 1], sizes = [16, 16], strides = [1, 1]} : vector<18x18xf32> to vector<16x16xf32>
    %c7_204 = arith.constant 7 : index
    %c3_205 = arith.constant 3 : index
    %340 = memref.load %arg4[%c7_204, %c3_205] : memref<9x4xf32, #tpu.memory_space<smem>>
    %341 = vector.broadcast %340 : f32 to vector<16x16xf32>
    %342 = arith.mulf %339, %341 : vector<16x16xf32>
    %343 = arith.addf %338, %342 : vector<16x16xf32>
    %344 = vector.extract_strided_slice %304 {offsets = [2, 2], sizes = [16, 16], strides = [1, 1]} : vector<18x18xf32> to vector<16x16xf32>
    %c8_206 = arith.constant 8 : index
    %c3_207 = arith.constant 3 : index
    %345 = memref.load %arg4[%c8_206, %c3_207] : memref<9x4xf32, #tpu.memory_space<smem>>
    %346 = vector.broadcast %345 : f32 to vector<16x16xf32>
    %347 = arith.mulf %344, %346 : vector<16x16xf32>
    %348 = arith.addf %343, %347 : vector<16x16xf32>
    %c3_208 = arith.constant 3 : index
    %349 = memref.load %arg5[%c3_208] : memref<4xf32, #tpu.memory_space<smem>>
    %350 = vector.broadcast %349 : f32 to vector<16x16xf32>
    %351 = arith.addf %348, %350 : vector<16x16xf32>
    %cst_209 = arith.constant 0.000000e+00 : f32
    %352 = vector.broadcast %cst_209 : f32 to vector<16x16xf32>
    %353 = arith.maximumf %351, %352 : vector<16x16xf32>
    %354 = tpu.concatenate %125, %133, %141, %149, %200, %251, %302, %353 in 1 : vector<16x16xf32>, vector<16x16xf32>, vector<16x16xf32>, vector<16x16xf32>, vector<16x16xf32>, vector<16x16xf32>, vector<16x16xf32>, vector<16x16xf32> -> vector<16x128xf32>
    %c0_210 = arith.constant 0 : index
    %c0_211 = arith.constant 0 : index
    %c0_212 = arith.constant 0 : index
    %355 = vector.load %arg8[%c0_210, %c0_211, %c0_212] : memref<1x16x128xf32, #tpu.memory_space<vmem>>, vector<1x16x128xf32>
    %356 = vector.shape_cast %355 : vector<1x16x128xf32> to vector<16x128xf32>
    %357 = vector.shape_cast %354 : vector<16x128xf32> to vector<1x16x128xf32>
    tpu.vector_store %arg8[%c0_210, %c0_211, %c0_212], %357 {strides = array<i32>} : memref<1x16x128xf32, #tpu.memory_space<vmem>>, vector<1x16x128xf32>,
    return
  }
  func.func @transform_0(%arg0: i32) -> (i32, i32, i32, i32) {
    %c0_i32 = arith.constant 0 : i32
    %c0_i32_0 = arith.constant 0 : i32
    %c0_i32_1 = arith.constant 0 : i32
    %c0_i32_2 = arith.constant 0 : i32
    return %arg0, %c0_i32, %c0_i32_0, %c0_i32_1 : i32, i32, i32, i32
  }
  func.func @transform_1(%arg0: i32) -> (i32, i32) {
    %c0_i32 = arith.constant 0 : i32
    %c0_i32_0 = arith.constant 0 : i32
    %c0_i32_1 = arith.constant 0 : i32
    return %c0_i32, %c0_i32_0 : i32, i32
  }
  func.func @transform_2(%arg0: i32) -> i32 {
    %c0_i32 = arith.constant 0 : i32
    %c0_i32_0 = arith.constant 0 : i32
    return %c0_i32 : i32
  }
  func.func @transform_3(%arg0: i32) -> (i32, i32) {
    %c0_i32 = arith.constant 0 : i32
    %c0_i32_0 = arith.constant 0 : i32
    %c0_i32_1 = arith.constant 0 : i32
    return %c0_i32, %c0_i32_0 : i32, i32
  }
  func.func @transform_4(%arg0: i32) -> i32 {
    %c0_i32 = arith.constant 0 : i32
    %c0_i32_0 = arith.constant 0 : i32
    return %c0_i32 : i32
  }
  func.func @transform_5(%arg0: i32) -> i32 {
    %c0_i32 = arith.constant 0 : i32
    %c0_i32_0 = arith.constant 0 : i32
    return %c0_i32 : i32
  }
  func.func @transform_6(%arg0: i32) -> i32 {
    %c0_i32 = arith.constant 0 : i32
    %c0_i32_0 = arith.constant 0 : i32
    return %c0_i32 : i32
  }
  func.func @transform_7(%arg0: i32) -> (i32, i32, i32) {
    %c0_i32 = arith.constant 0 : i32
    %c0_i32_0 = arith.constant 0 : i32
    %c0_i32_1 = arith.constant 0 : i32
    return %arg0, %c0_i32, %c0_i32_0 : i32, i32, i32
  }
}

</mosaic_0001>

<llo_original>
// kernel: tpu_custom_call.1
$region0: #{tpu_custom_call.1}
  #allocation0 [shape = 'u32[]', space=smem, size = 0x4, offset = 0x4, fixed_abs, tag = 'smem constant byte address 0x4 - core index']
  #allocation1 [shape = 'u32[72,128]{1,0:T(1,128)}', space=vmem, size = 0x9000, scoped, tag = 'internal scratch']
  #allocation2 [shape = 'f32[4,18,18]{2,1,0:T(8,128)}', space=vmem, size = 0xc000, scoped, tag = 'scratch operand']
  %s0 = inlined_call_operand.hbm [shape: f32[2,4,16,16], index: 0, kind: input, shape index: {}]
  %s1 = inlined_call_operand.vmem [shape: f32[4,4], index: 1, kind: input, shape index: {}]
  %s2 = inlined_call_operand.vmem [shape: f32[4], index: 2, kind: input, shape index: {}]
  %s3 = inlined_call_operand.vmem [shape: f32[9,4], index: 3, kind: input, shape index: {}]
  %s4 = inlined_call_operand.vmem [shape: f32[4], index: 4, kind: input, shape index: {}]
  %s5 = inlined_call_operand.vmem [shape: f32[4], index: 5, kind: input, shape index: {}]
  %s6 = inlined_call_operand.vmem [shape: f32[4], index: 6, kind: input, shape index: {}]
  %s7 = inlined_call_operand.hbm [shape: f32[2,16,128], index: 7, kind: output, shape index: {}]
  %s8 = sld [smem:[#allocation0]]
  $region89: #{tpu_custom_call.1} parent=0
    _
  %s10 = ssub.s32 1, %s8
  %s11 = scalar_select 0, %s10, %s8
  $region1: #{tpu_custom_call.1} parent=0
    #allocation3 [shape = 'u8[65536]{0}', space=vmem, size = 0x10000, scoped, tag = 'input window, operand 0']
    #allocation4 [shape = 's32[2]{0}', space=sflag, size = 0x8, scoped, tag = 'scoped memory for tpu_custom_call.1']
    #allocation5 [shape = 's32[2]{0}', space=sflag, size = 0x8, scoped, tag = 'scoped memory for tpu_custom_call.1']
    #allocation6 [shape = 's32[2]{0}', space=sflag, size = 0x8, scoped, tag = 'scoped memory for tpu_custom_call.1']
    #allocation7 [shape = 'u8[2048]{0}', space=smem, size = 0x800, scoped, tag = 'input window, operand 1, single buffered']
    #allocation8 [shape = 'u8[512]{0}', space=smem, size = 0x200, scoped, tag = 'input window, operand 2, single buffered']
    #allocation9 [shape = 's32[1]{0}', space=sflag, size = 0x4, scoped, tag = 'scoped memory for tpu_custom_call.1']
    #allocation10 [shape = 'u8[8192]{0}', space=smem, size = 0x2000, scoped, tag = 'input window, operand 3, single buffered']
    #allocation11 [shape = 'u8[512]{0}', space=smem, size = 0x200, scoped, tag = 'input window, operand 4, single buffered']
    #allocation12 [shape = 's32[1]{0}', space=sflag, size = 0x4, scoped, tag = 'scoped memory for tpu_custom_call.1']
    #allocation13 [shape = 'u8[512]{0}', space=smem, size = 0x200, scoped, tag = 'input window, operand 5, single buffered']
    #allocation14 [shape = 'u8[512]{0}', space=smem, size = 0x200, scoped, tag = 'input window, operand 6, single buffered']
    #allocation15 [shape = 's32[1]{0}', space=sflag, size = 0x4, scoped, tag = 'scoped memory for tpu_custom_call.1']
    #allocation16 [shape = 'u8[16384]{0}', space=vmem, size = 0x4000, scoped, tag = 'output window, operand 0']
    %12 = vsyncpa [#allocation4], 0
    %s13 = scalar_lea.sflag [#allocation4], 1
    %14 = vsyncpa %s13, 0
    %15 = vsyncpa [#allocation6], 0
    %16 = vsyncpa [#allocation9], 0
    %17 = vsyncpa [#allocation12], 0
    %18 = vsyncpa [#allocation15], 0
    %19 = vsyncpa [#allocation5], 0
    %s20 = scalar_lea.sflag [#allocation5], 1
    %21 = vsyncpa %s20, 0
    loop: start=0, step=1, limit=4
    $region2: #{tpu_custom_call.1} parent=1 // loop_pre_header
      _
    $region3: #{tpu_custom_call.1} parent=1 // loop_header
      %s23 = sphi 0, %s27
      %p24 = scmp.ge.s32.totalorder %s23, 4
      %s33 = sphi 0, %s35
      %s36 = sphi 0, %s33
      %s37 = sphi 0, %s36
      %s53 = sphi 0, %s37
      %s57 = sphi 0, %s57
      %s59 = sphi 0, %s57
      %s60 = sphi 0, %s59
      %s74 = sphi 0, %s60
      %s78 = sphi 0, %s78
      %s80 = sphi 0, %s78
      %s81 = sphi 0, %s80
      %s95 = sphi 0, %s81
      %s99 = sphi 0, %s99
      %s101 = sphi 0, %s99
      %s102 = sphi 0, %s101
      %s116 = sphi 0, %s102
      %s120 = sphi 0, %s120
      %s122 = sphi 0, %s120
      %s123 = sphi 0, %s122
      %s137 = sphi 0, %s123
      %s141 = sphi 0, %s141
      %s143 = sphi 0, %s141
      %s144 = sphi 0, %s143
      %s158 = sphi 0, %s144
      %s162 = sphi 0, %s162
      %s164 = sphi 0, %s162
      %s165 = sphi 0, %s164
      %s179 = sphi 0, %s165
      %s185 = sphi 0, %s187
      %s188 = sphi 0, %s185
      %s189 = sphi 0, %s188
      %s205 = sphi 0, %s189
    $region4: #{tpu_custom_call.1} parent=1 // loop_header_branch
      %26 = sbr.rel (%p24) target = $region8
    $region5: #{tpu_custom_call.1} parent=1 // loop_body
      %s28 = ssub.s32 %s23, 1
      %s29 = ssub.s32 %s23, 2
      %s30 = sadd.s32 %s23, 1
      %s31 = ssub.s32 %s23, %s30
      %p32 = scmp.eq.s32.totalorder %s31, 0
      %s34 = sadd.s32 %s33, 1
      %s35 = scalar_select %p32, %s33, %s34
      %p38 = pneg %p32
      %p39 = scmp.eq.s32.totalorder %s23, 1
      %p40 = por %p38, %p39
      %p41 = scmp.ne.s32.totalorder %s33, %s36
      %p42 = scmp.eq.s32.totalorder %s23, 0
      %p43 = por %p41, %p42
      %p44 = scmp.ne.s32.totalorder %s33, %s36
      %p45 = scmp.eq.s32.totalorder %s28, 1
      %p46 = por %p44, %p45
      %p47 = scmp.ne.s32.totalorder %s36, %s37
      %p48 = scmp.eq.s32.totalorder %s28, 0
      %p49 = por %p47, %p48
      %p50 = scmp.ne.s32.totalorder %s36, %s37
      %p51 = scmp.eq.s32.totalorder %s29, 1
      %p52 = por %p50, %p51
      %p54 = scmp.ne.s32.totalorder %s37, %s53
      %p55 = scmp.eq.s32.totalorder %s29, 0
      %p56 = por %p54, %p55
      %s58 = sadd.s32 %s57, 1
      %p61 = scmp.eq.s32.totalorder %s23, 1
      %p62 = scmp.ne.s32.totalorder %s57, %s59
      %p63 = scmp.eq.s32.totalorder %s23, 0
      %p64 = por %p62, %p63
      %p65 = scmp.ne.s32.totalorder %s57, %s59
      %p66 = scmp.eq.s32.totalorder %s28, 1
      %p67 = por %p65, %p66
      %p68 = scmp.ne.s32.totalorder %s59, %s60
      %p69 = scmp.eq.s32.totalorder %s28, 0
      %p70 = por %p68, %p69
      %p71 = scmp.ne.s32.totalorder %s59, %s60
      %p72 = scmp.eq.s32.totalorder %s29, 1
      %p73 = por %p71, %p72
      %p75 = scmp.ne.s32.totalorder %s60, %s74
      %p76 = scmp.eq.s32.totalorder %s29, 0
      %p77 = por %p75, %p76
      %s79 = sadd.s32 %s78, 1
      %p82 = scmp.eq.s32.totalorder %s23, 1
      %p83 = scmp.ne.s32.totalorder %s78, %s80
      %p84 = scmp.eq.s32.totalorder %s23, 0
      %p85 = por %p83, %p84
      %p86 = scmp.ne.s32.totalorder %s78, %s80
      %p87 = scmp.eq.s32.totalorder %s28, 1
      %p88 = por %p86, %p87
      %p89 = scmp.ne.s32.totalorder %s80, %s81
      %p90 = scmp.eq.s32.totalorder %s28, 0
      %p91 = por %p89, %p90
      %p92 = scmp.ne.s32.totalorder %s80, %s81
      %p93 = scmp.eq.s32.totalorder %s29, 1
      %p94 = por %p92, %p93
      %p96 = scmp.ne.s32.totalorder %s81, %s95
      %p97 = scmp.eq.s32.totalorder %s29, 0
      %p98 = por %p96, %p97
      %s100 = sadd.s32 %s99, 1
      %p103 = scmp.eq.s32.totalorder %s23, 1
      %p104 = scmp.ne.s32.totalorder %s99, %s101
      %p105 = scmp.eq.s32.totalorder %s23, 0
      %p106 = por %p104, %p105
      %p107 = scmp.ne.s32.totalorder %s99, %s101
      %p108 = scmp.eq.s32.totalorder %s28, 1
      %p109 = por %p107, %p108
      %p110 = scmp.ne.s32.totalorder %s101, %s102
      %p111 = scmp.eq.s32.totalorder %s28, 0
      %p112 = por %p110, %p111
      %p113 = scmp.ne.s32.totalorder %s101, %s102
      %p114 = scmp.eq.s32.totalorder %s29, 1
      %p115 = por %p113, %p114
      %p117 = scmp.ne.s32.totalorder %s102, %s116
      %p118 = scmp.eq.s32.totalorder %s29, 0
      %p119 = por %p117, %p118
      %s121 = sadd.s32 %s120, 1
      %p124 = scmp.eq.s32.totalorder %s23, 1
      %p125 = scmp.ne.s32.totalorder %s120, %s122
      %p126 = scmp.eq.s32.totalorder %s23, 0
      %p127 = por %p125, %p126
      %p128 = scmp.ne.s32.totalorder %s120, %s122
      %p129 = scmp.eq.s32.totalorder %s28, 1
      %p130 = por %p128, %p129
      %p131 = scmp.ne.s32.totalorder %s122, %s123
      %p132 = scmp.eq.s32.totalorder %s28, 0
      %p133 = por %p131, %p132
      %p134 = scmp.ne.s32.totalorder %s122, %s123
      %p135 = scmp.eq.s32.totalorder %s29, 1
      %p136 = por %p134, %p135
      %p138 = scmp.ne.s32.totalorder %s123, %s137
      %p139 = scmp.eq.s32.totalorder %s29, 0
      %p140 = por %p138, %p139
      %s142 = sadd.s32 %s141, 1
      %p145 = scmp.eq.s32.totalorder %s23, 1
      %p146 = scmp.ne.s32.totalorder %s141, %s143
      %p147 = scmp.eq.s32.totalorder %s23, 0
      %p148 = por %p146, %p147
      %p149 = scmp.ne.s32.totalorder %s141, %s143
      %p150 = scmp.eq.s32.totalorder %s28, 1
      %p151 = por %p149, %p150
      %p152 = scmp.ne.s32.totalorder %s143, %s144
      %p153 = scmp.eq.s32.totalorder %s28, 0
      %p154 = por %p152, %p153
      %p155 = scmp.ne.s32.totalorder %s143, %s144
      %p156 = scmp.eq.s32.totalorder %s29, 1
      %p157 = por %p155, %p156
      %p159 = scmp.ne.s32.totalorder %s144, %s158
      %p160 = scmp.eq.s32.totalorder %s29, 0
      %p161 = por %p159, %p160
      %s163 = sadd.s32 %s162, 1
      %p166 = scmp.eq.s32.totalorder %s23, 1
      %p167 = scmp.ne.s32.totalorder %s162, %s164
      %p168 = scmp.eq.s32.totalorder %s23, 0
      %p169 = por %p167, %p168
      %p170 = scmp.ne.s32.totalorder %s162, %s164
      %p171 = scmp.eq.s32.totalorder %s28, 1
      %p172 = por %p170, %p171
      %p173 = scmp.ne.s32.totalorder %s164, %s165
      %p174 = scmp.eq.s32.totalorder %s28, 0
      %p175 = por %p173, %p174
      %p176 = scmp.ne.s32.totalorder %s164, %s165
      %p177 = scmp.eq.s32.totalorder %s29, 1
      %p178 = por %p176, %p177
      %p180 = scmp.ne.s32.totalorder %s165, %s179
      %p181 = scmp.eq.s32.totalorder %s29, 0
      %p182 = por %p180, %p181
      %s183 = ssub.s32 %s23, %s30
      %p184 = scmp.eq.s32.totalorder %s183, 0
      %s186 = sadd.s32 %s185, 1
      %s187 = scalar_select %p184, %s185, %s186
      %p190 = pneg %p184
      %p191 = scmp.eq.s32.totalorder %s23, 1
      %p192 = por %p190, %p191
      %p193 = scmp.ne.s32.totalorder %s185, %s188
      %p194 = scmp.eq.s32.totalorder %s23, 0
      %p195 = por %p193, %p194
      %p196 = scmp.ne.s32.totalorder %s185, %s188
      %p197 = scmp.eq.s32.totalorder %s28, 1
      %p198 = por %p196, %p197
      %p199 = scmp.ne.s32.totalorder %s188, %s189
      %p200 = scmp.eq.s32.totalorder %s28, 0
      %p201 = por %p199, %p200
      %p202 = scmp.ne.s32.totalorder %s188, %s189
      %p203 = scmp.eq.s32.totalorder %s29, 1
      %p204 = por %p202, %p203
      %p206 = scmp.ne.s32.totalorder %s189, %s205
      %p207 = scmp.eq.s32.totalorder %s29, 0
      %p208 = por %p206, %p207
      %p209 = scmp.le.s32.totalorder 1, %s23
      %p210 = scmp.lt.s32.totalorder %s23, 3
      %p211 = pnand %p209, %p210
      %p212 = pneg %p211
      // Predicated region
      $region9: #{tpu_custom_call.1} parent=5 // pred_check
        _
      $region10: #{tpu_custom_call.1} parent=5 // pred_check_branch
        %214 = sbr.rel (%p211) target = $region12
      $region11: #{tpu_custom_call.1} parent=5 // pred_region
        %s215 = ssub.s32 %s23, 1
        // Predicated region
        $region13: #{tpu_custom_call.1} parent=11 // pred_check
          %p216 = pneg %p70
        $region14: #{tpu_custom_call.1} parent=11 // pred_check_branch
          %218 = sbr.rel (%p216) target = $region16
        $region15: #{tpu_custom_call.1} parent=11 // pred_region
          %220 = vsyncadd [#allocation6], 0
          %s222 = sshll.u32 %s1, 4
          %s223 = int_to_ptr.vmem [resolvable:$true] %s222
          %225 = dma.vmem_to_smem %s223, 64, [#allocation7], [#allocation6]
        $region16: #{tpu_custom_call.1} parent=11 // pred_fallthru
          _
        // Predicated region
        $region17: #{tpu_custom_call.1} parent=11 // pred_check
          %p226 = pneg %p91
        $region18: #{tpu_custom_call.1} parent=11 // pred_check_branch
          %228 = sbr.rel (%p226) target = $region20
        $region19: #{tpu_custom_call.1} parent=11 // pred_region
          %230 = vsyncadd [#allocation9], 0
          %s232 = sshll.u32 %s2, 4
          %s233 = int_to_ptr.vmem [resolvable:$true] %s232
          %235 = dma.vmem_to_smem %s233, 16, [#allocation8], [#allocation9]
        $region20: #{tpu_custom_call.1} parent=11 // pred_fallthru
          _
        // Predicated region
        $region21: #{tpu_custom_call.1} parent=11 // pred_check
          %p236 = pneg %p112
        $region22: #{tpu_custom_call.1} parent=11 // pred_check_branch
          %238 = sbr.rel (%p236) target = $region24
        $region23: #{tpu_custom_call.1} parent=11 // pred_region
          %240 = vsyncadd [#allocation9], 0
          %s241 = sshll.u32 %s3, 4
          %s242 = int_to_ptr.vmem [resolvable:$true] %s241
          %247 = dma.vmem_to_smem %s242, 256, [#allocation10], [#allocation9], 128, 128, 8
        $region24: #{tpu_custom_call.1} parent=11 // pred_fallthru
          _
        // Predicated region
        $region25: #{tpu_custom_call.1} parent=11 // pred_check
          %p248 = pneg %p133
        $region26: #{tpu_custom_call.1} parent=11 // pred_check_branch
          %250 = sbr.rel (%p248) target = $region28
        $region27: #{tpu_custom_call.1} parent=11 // pred_region
          %252 = vsyncadd [#allocation12], 0
          %s254 = sshll.u32 %s4, 4
          %s255 = int_to_ptr.vmem [resolvable:$true] %s254
          %257 = dma.vmem_to_smem %s255, 16, [#allocation11], [#allocation12]
        $region28: #{tpu_custom_call.1} parent=11 // pred_fallthru
          _
        // Predicated region
        $region29: #{tpu_custom_call.1} parent=11 // pred_check
          %p258 = pneg %p154
        $region30: #{tpu_custom_call.1} parent=11 // pred_check_branch
          %260 = sbr.rel (%p258) target = $region32
        $region31: #{tpu_custom_call.1} parent=11 // pred_region
          %262 = vsyncadd [#allocation12], 0
          %s264 = sshll.u32 %s5, 4
          %s265 = int_to_ptr.vmem [resolvable:$true] %s264
          %267 = dma.vmem_to_smem %s265, 16, [#allocation13], [#allocation12]
        $region32: #{tpu_custom_call.1} parent=11 // pred_fallthru
          _
        // Predicated region
        $region33: #{tpu_custom_call.1} parent=11 // pred_check
          %p268 = pneg %p175
        $region34: #{tpu_custom_call.1} parent=11 // pred_check_branch
          %270 = sbr.rel (%p268) target = $region36
        $region35: #{tpu_custom_call.1} parent=11 // pred_region
          %272 = vsyncadd [#allocation15], 0
          %s274 = sshll.u32 %s6, 4
          %s275 = int_to_ptr.vmem [resolvable:$true] %s274
          %277 = dma.vmem_to_smem %s275, 16, [#allocation14], [#allocation15]
        $region36: #{tpu_custom_call.1} parent=11 // pred_fallthru
          _
      $region12: #{tpu_custom_call.1} parent=5 // pred_fallthru
        _
      %p278 = scmp.lt.s32.totalorder %s23, 2
      // Predicated region
      $region37: #{tpu_custom_call.1} parent=5 // pred_check
        %p279 = pneg %p278
      $region38: #{tpu_custom_call.1} parent=5 // pred_check_branch
        %281 = sbr.rel (%p279) target = $region40
      $region39: #{tpu_custom_call.1} parent=5 // pred_region
        // Predicated region
        $region41: #{tpu_custom_call.1} parent=39 // pred_check
          %p282 = pneg %p43
        $region42: #{tpu_custom_call.1} parent=39 // pred_check_branch
          %284 = sbr.rel (%p282) target = $region44
        $region43: #{tpu_custom_call.1} parent=39 // pred_region
          %s285 = sand.u32 %s33, 1
          %s286 = scalar_lea.sflag [#allocation4], %s285
          %s287 = sand.u32 %s33, 1
          %s288 = smul.addr %s287, 64
          %s289 = scalar_lea.vmem [#allocation3], %s288
          %291 = vsyncadd %s286, 0
          %s292 = smul.addr %s23, 8
          %s293 = smul.addr %s292, 8
          %s294 = scalar_lea.hbm %s0, %s293
          %s295 = sshll.u32 %s294, 4
          %s296 = int_to_ptr.hbm [resolvable:$true] %s295
          %s297 = sshll.u32 %s289, 4
          %s298 = int_to_ptr.vmem [resolvable:$true] %s297
          %303 = dma.hbm_to_vmem [thread:$0]  %s296, 1024, %s298, %s286, 128, 128, 8
        $region44: #{tpu_custom_call.1} parent=39 // pred_fallthru
          _
      $region40: #{tpu_custom_call.1} parent=5 // pred_fallthru
        _
      %p304 = scmp.le.s32.totalorder 1, %s23
      %p305 = scmp.lt.s32.totalorder %s23, 3
      %p306 = pnand %p304, %p305
      %p307 = pneg %p306
      // Predicated region
      $region45: #{tpu_custom_call.1} parent=5 // pred_check
        _
      $region46: #{tpu_custom_call.1} parent=5 // pred_check_branch
        %309 = sbr.rel (%p306) target = $region48
      $region47: #{tpu_custom_call.1} parent=5 // pred_region
        %s310 = ssub.s32 %s23, 1
        %s311 = sand.u32 %s36, 1
        %s312 = scalar_lea.sflag [#allocation4], %s311
        %s313 = sand.u32 %s36, 1
        %s314 = smul.addr %s313, 64
        %s315 = scalar_lea.vmem [#allocation3], %s314
        // Predicated region
        $region49: #{tpu_custom_call.1} parent=47 // pred_check
          %p316 = pneg %p49
        $region50: #{tpu_custom_call.1} parent=47 // pred_check_branch
          %318 = sbr.rel (%p316) target = $region52
        $region51: #{tpu_custom_call.1} parent=47 // pred_region
          %320 = dma.done %s312, 1024
        $region52: #{tpu_custom_call.1} parent=47 // pred_fallthru
          _
        // Predicated region
        $region53: #{tpu_custom_call.1} parent=47 // pred_check
          %p321 = pneg %p70
        $region54: #{tpu_custom_call.1} parent=47 // pred_check_branch
          %323 = sbr.rel (%p321) target = $region56
        $region55: #{tpu_custom_call.1} parent=47 // pred_region
          %325 = dma.done [#allocation6], 64
        $region56: #{tpu_custom_call.1} parent=47 // pred_fallthru
          _
        // Predicated region
        $region57: #{tpu_custom_call.1} parent=47 // pred_check
          %p326 = pneg %p91
        $region58: #{tpu_custom_call.1} parent=47 // pred_check_branch
          %328 = sbr.rel (%p326) target = $region60
        $region59: #{tpu_custom_call.1} parent=47 // pred_region
          %330 = dma.done [#allocation9], 16
        $region60: #{tpu_custom_call.1} parent=47 // pred_fallthru
          _
        // Predicated region
        $region61: #{tpu_custom_call.1} parent=47 // pred_check
          %p331 = pneg %p112
        $region62: #{tpu_custom_call.1} parent=47 // pred_check_branch
          %333 = sbr.rel (%p331) target = $region64
        $region63: #{tpu_custom_call.1} parent=47 // pred_region
          %335 = dma.done [#allocation9], 256
        $region64: #{tpu_custom_call.1} parent=47 // pred_fallthru
          _
        // Predicated region
        $region65: #{tpu_custom_call.1} parent=47 // pred_check
          %p336 = pneg %p133
        $region66: #{tpu_custom_call.1} parent=47 // pred_check_branch
          %338 = sbr.rel (%p336) target = $region68
        $region67: #{tpu_custom_call.1} parent=47 // pred_region
          %340 = dma.done [#allocation12], 16
        $region68: #{tpu_custom_call.1} parent=47 // pred_fallthru
          _
        // Predicated region
        $region69: #{tpu_custom_call.1} parent=47 // pred_check
          %p341 = pneg %p154
        $region70: #{tpu_custom_call.1} parent=47 // pred_check_branch
          %343 = sbr.rel (%p341) target = $region72
        $region71: #{tpu_custom_call.1} parent=47 // pred_region
          %345 = dma.done [#allocation12], 16
        $region72: #{tpu_custom_call.1} parent=47 // pred_fallthru
          _
        // Predicated region
        $region73: #{tpu_custom_call.1} parent=47 // pred_check
          %p346 = pneg %p175
        $region74: #{tpu_custom_call.1} parent=47 // pred_check_branch
          %348 = sbr.rel (%p346) target = $region76
        $region75: #{tpu_custom_call.1} parent=47 // pred_region
          %350 = dma.done [#allocation15], 16
        $region76: #{tpu_custom_call.1} parent=47 // pred_fallthru
          _
        %351 = sfence
        %s352 = sand.u32 %s36, 1
        %s353 = scalar_lea.sflag [#allocation4], %s352
        %s354 = sand.u32 %s36, 1
        %s355 = smul.addr %s354, 64
        %s356 = scalar_lea.vmem [#allocation3], %s355
        %p357 = pneg %p49
        %p358 = pneg %p46
        %p359 = pneg %p70
        %p360 = pneg %p67
        %p361 = pneg %p91
        %p362 = pneg %p88
        %p363 = pneg %p112
        %p364 = pneg %p109
        %p365 = pneg %p133
        %p366 = pneg %p130
        %p367 = pneg %p154
        %p368 = pneg %p151
        %p369 = pneg %p175
        %p370 = pneg %p172
        %p371 = pneg %p201
        %p372 = pneg %p198
        %s373 = sand.u32 %s188, 1
        %s374 = scalar_lea.sflag [#allocation5], %s373
        %s375 = sand.u32 %s188, 1
        %s376 = smul.addr %s375, 16
        %s377 = scalar_lea.vmem [#allocation16], %s376
        %vm378 = vcmask 146432
        %379 = vst.msk [vmem:[#allocation2] sm:$0xff] %vm378, 0.0
        %380 = vst.msk [vmem:[#allocation2 + $0x8] sm:$0xff] %vm378, 0.0
        %vm381 = vcmask 140288
        %382 = vst.msk [vmem:[#allocation2 + $0x10] sm:$0x3] %vm381, 0.0
        %383 = vst.msk [vmem:[#allocation2 + $0x18] sm:$0xff] %vm378, 0.0
        %384 = vst.msk [vmem:[#allocation2 + $0x20] sm:$0xff] %vm378, 0.0
        %385 = vst.msk [vmem:[#allocation2 + $0x28] sm:$0x3] %vm381, 0.0
        %386 = vst.msk [vmem:[#allocation2 + $0x30] sm:$0xff] %vm378, 0.0
        %387 = vst.msk [vmem:[#allocation2 + $0x38] sm:$0xff] %vm378, 0.0
        %388 = vst.msk [vmem:[#allocation2 + $0x40] sm:$0x3] %vm381, 0.0
        %389 = vst.msk [vmem:[#allocation2 + $0x48] sm:$0xff] %vm378, 0.0
        %390 = vst.msk [vmem:[#allocation2 + $0x50] sm:$0xff] %vm378, 0.0
        %391 = vst.msk [vmem:[#allocation2 + $0x58] sm:$0x3] %vm381, 0.0
        %v392 = vld [vmem:[%s315] sm:$0xff]
        %v393 = vld [vmem:[%s315 + $0x8] sm:$0xff]
        %s394 = sld [smem:[#allocation7]]
        %v395 = vstv %s394
        %v396 = vmul.f32 %v392, %v395
        %v397 = vmul.f32 %v393, %v395
        %s398 = scalar_lea.vmem %s315, 16 [#allocation3]
        %v399 = vld [vmem:[%s398] sm:$0xff]
        %v400 = vld [vmem:[%s398 + $0x8] sm:$0xff]
        %s401 = sld [smem:[#allocation7 + $0x80]]
        %v402 = vstv %s401
        %v403 = vmul.f32 %v399, %v402
        %v404 = vmul.f32 %v400, %v402
        %v405 = vadd.f32 %v396, %v403
        %v406 = vadd.f32 %v397, %v404
        %s407 = scalar_lea.vmem %s315, 32 [#allocation3]
        %v408 = vld [vmem:[%s407] sm:$0xff]
        %v409 = vld [vmem:[%s407 + $0x8] sm:$0xff]
        %s410 = sld [smem:[#allocation7 + $0x100]]
        %v411 = vstv %s410
        %v412 = vmul.f32 %v408, %v411
        %v413 = vmul.f32 %v409, %v411
        %v414 = vadd.f32 %v405, %v412
        %v415 = vadd.f32 %v406, %v413
        %s416 = scalar_lea.vmem %s315, 48 [#allocation3]
        %v417 = vld [vmem:[%s416] sm:$0xff]
        %v418 = vld [vmem:[%s416 + $0x8] sm:$0xff]
        %s419 = sld [smem:[#allocation7 + $0x180]]
        %v420 = vstv %s419
        %v421 = vmul.f32 %v417, %v420
        %v422 = vmul.f32 %v418, %v420
        %v423 = vadd.f32 %v414, %v421
        %v424 = vadd.f32 %v415, %v422
        %s425 = sld [smem:[#allocation8]]
        %v426 = vstv %s425
        %v427 = vadd.f32 %v423, %v426
        %v428 = vadd.f32 %v424, %v426
        %431 = vrot.lane.b32.xlu0 %v427, 1
        %v432 = vpop.permute.xlu0 %431
        %433 = vrot.lane.b32.xlu0 %v428, 1
        %v434 = vpop.permute.xlu0 %433
        %vm437 = vcmask 138248
        %438 = vst.msk [vmem:[#allocation2 + $0x1] sm:$0xff] %vm437, %v432
        %439 = vst.msk [vmem:[#allocation2 + $0x9] sm:$0xff] %vm437, %v434
        %v440 = vld [vmem:[%s315] sm:$0xff]
        %v441 = vld [vmem:[%s315 + $0x8] sm:$0xff]
        %s442 = sld [smem:[#allocation7 + $0x1]]
        %v443 = vstv %s442
        %v444 = vmul.f32 %v440, %v443
        %v445 = vmul.f32 %v441, %v443
        %v446 = vld [vmem:[%s398] sm:$0xff]
        %v447 = vld [vmem:[%s398 + $0x8] sm:$0xff]
        %s448 = sld [smem:[#allocation7 + $0x81]]
        %v449 = vstv %s448
        %v450 = vmul.f32 %v446, %v449
        %v451 = vmul.f32 %v447, %v449
        %v452 = vadd.f32 %v444, %v450
        %v453 = vadd.f32 %v445, %v451
        %v454 = vld [vmem:[%s407] sm:$0xff]
        %v455 = vld [vmem:[%s407 + $0x8] sm:$0xff]
        %s456 = sld [smem:[#allocation7 + $0x101]]
        %v457 = vstv %s456
        %v458 = vmul.f32 %v454, %v457
        %v459 = vmul.f32 %v455, %v457
        %v460 = vadd.f32 %v452, %v458
        %v461 = vadd.f32 %v453, %v459
        %v462 = vld [vmem:[%s416] sm:$0xff]
        %v463 = vld [vmem:[%s416 + $0x8] sm:$0xff]
        %s464 = sld [smem:[#allocation7 + $0x181]]
        %v465 = vstv %s464
        %v466 = vmul.f32 %v462, %v465
        %v467 = vmul.f32 %v463, %v465
        %v468 = vadd.f32 %v460, %v466
        %v469 = vadd.f32 %v461, %v467
        %s470 = sld [smem:[#allocation8 + $0x1]]
        %v471 = vstv %s470
        %v472 = vadd.f32 %v468, %v471
        %v473 = vadd.f32 %v469, %v471
        %476 = vrot.lane.b32.xlu0 %v472, 1
        %v477 = vpop.permute.xlu0 %476
        %478 = vrot.lane.b32.xlu0 %v473, 1
        %v479 = vpop.permute.xlu0 %478
        %s482 = scalar_lea.vmem [#allocation2], 24
        %483 = vst.msk [vmem:[%s482 + $0x1] sm:$0xff] %vm437, %v477
        %484 = vst.msk [vmem:[%s482 + $0x9] sm:$0xff] %vm437, %v479
        %v485 = vld [vmem:[%s315] sm:$0xff]
        %v486 = vld [vmem:[%s315 + $0x8] sm:$0xff]
        %s487 = sld [smem:[#allocation7 + $0x2]]
        %v488 = vstv %s487
        %v489 = vmul.f32 %v485, %v488
        %v490 = vmul.f32 %v486, %v488
        %v491 = vld [vmem:[%s398] sm:$0xff]
        %v492 = vld [vmem:[%s398 + $0x8] sm:$0xff]
        %s493 = sld [smem:[#allocation7 + $0x82]]
        %v494 = vstv %s493
        %v495 = vmul.f32 %v491, %v494
        %v496 = vmul.f32 %v492, %v494
        %v497 = vadd.f32 %v489, %v495
        %v498 = vadd.f32 %v490, %v496
        %v499 = vld [vmem:[%s407] sm:$0xff]
        %v500 = vld [vmem:[%s407 + $0x8] sm:$0xff]
        %s501 = sld [smem:[#allocation7 + $0x102]]
        %v502 = vstv %s501
        %v503 = vmul.f32 %v499, %v502
        %v504 = vmul.f32 %v500, %v502
        %v505 = vadd.f32 %v497, %v503
        %v506 = vadd.f32 %v498, %v504
        %v507 = vld [vmem:[%s416] sm:$0xff]
        %v508 = vld [vmem:[%s416 + $0x8] sm:$0xff]
        %s509 = sld [smem:[#allocation7 + $0x182]]
        %v510 = vstv %s509
        %v511 = vmul.f32 %v507, %v510
        %v512 = vmul.f32 %v508, %v510
        %v513 = vadd.f32 %v505, %v511
        %v514 = vadd.f32 %v506, %v512
        %s515 = sld [smem:[#allocation8 + $0x2]]
        %v516 = vstv %s515
        %v517 = vadd.f32 %v513, %v516
        %v518 = vadd.f32 %v514, %v516
        %521 = vrot.lane.b32.xlu0 %v517, 1
        %v522 = vpop.permute.xlu0 %521
        %523 = vrot.lane.b32.xlu0 %v518, 1
        %v524 = vpop.permute.xlu0 %523
        %s527 = scalar_lea.vmem [#allocation2], 48
        %528 = vst.msk [vmem:[%s527 + $0x1] sm:$0xff] %vm437, %v522
        %529 = vst.msk [vmem:[%s527 + $0x9] sm:$0xff] %vm437, %v524
        %v530 = vld [vmem:[%s315] sm:$0xff]
        %v531 = vld [vmem:[%s315 + $0x8] sm:$0xff]
        %s532 = sld [smem:[#allocation7 + $0x3]]
        %v533 = vstv %s532
        %v534 = vmul.f32 %v530, %v533
        %v535 = vmul.f32 %v531, %v533
        %v536 = vld [vmem:[%s398] sm:$0xff]
        %v537 = vld [vmem:[%s398 + $0x8] sm:$0xff]
        %s538 = sld [smem:[#allocation7 + $0x83]]
        %v539 = vstv %s538
        %v540 = vmul.f32 %v536, %v539
        %v541 = vmul.f32 %v537, %v539
        %v542 = vadd.f32 %v534, %v540
        %v543 = vadd.f32 %v535, %v541
        %v544 = vld [vmem:[%s407] sm:$0xff]
        %v545 = vld [vmem:[%s407 + $0x8] sm:$0xff]
        %s546 = sld [smem:[#allocation7 + $0x103]]
        %v547 = vstv %s546
        %v548 = vmul.f32 %v544, %v547
        %v549 = vmul.f32 %v545, %v547
        %v550 = vadd.f32 %v542, %v548
        %v551 = vadd.f32 %v543, %v549
        %v552 = vld [vmem:[%s416] sm:$0xff]
        %v553 = vld [vmem:[%s416 + $0x8] sm:$0xff]
        %s554 = sld [smem:[#allocation7 + $0x183]]
        %v555 = vstv %s554
        %v556 = vmul.f32 %v552, %v555
        %v557 = vmul.f32 %v553, %v555
        %v558 = vadd.f32 %v550, %v556
        %v559 = vadd.f32 %v551, %v557
        %s560 = sld [smem:[#allocation8 + $0x3]]
        %v561 = vstv %s560
        %v562 = vadd.f32 %v558, %v561
        %v563 = vadd.f32 %v559, %v561
        %566 = vrot.lane.b32.xlu0 %v562, 1
        %v567 = vpop.permute.xlu0 %566
        %568 = vrot.lane.b32.xlu0 %v563, 1
        %v569 = vpop.permute.xlu0 %568
        %s572 = scalar_lea.vmem [#allocation2], 72
        %573 = vst.msk [vmem:[%s572 + $0x1] sm:$0xff] %vm437, %v567
        %574 = vst.msk [vmem:[%s572 + $0x9] sm:$0xff] %vm437, %v569
        %s575 = sld [smem:[#allocation13]]
        %v576 = vstv %s575
        %v577 = vmul.f32 %v427, %v576
        %v578 = vmul.f32 %v428, %v576
        %s579 = sld [smem:[#allocation14]]
        %v580 = vstv %s579
        %v581 = vadd.f32 %v577, %v580
        %v582 = vadd.f32 %v578, %v580
        %v583 = vmax.f32 %v581, 0.0
        %v584 = vmax.f32 %v582, 0.0
        %s585 = sld [smem:[#allocation13 + $0x1]]
        %v586 = vstv %s585
        %v587 = vmul.f32 %v472, %v586
        %v588 = vmul.f32 %v473, %v586
        %s589 = sld [smem:[#allocation14 + $0x1]]
        %v590 = vstv %s589
        %v591 = vadd.f32 %v587, %v590
        %v592 = vadd.f32 %v588, %v590
        %v593 = vmax.f32 %v591, 0.0
        %v594 = vmax.f32 %v592, 0.0
        %s595 = sld [smem:[#allocation13 + $0x2]]
        %v596 = vstv %s595
        %v597 = vmul.f32 %v517, %v596
        %v598 = vmul.f32 %v518, %v596
        %s599 = sld [smem:[#allocation14 + $0x2]]
        %v600 = vstv %s599
        %v601 = vadd.f32 %v597, %v600
        %v602 = vadd.f32 %v598, %v600
        %v603 = vmax.f32 %v601, 0.0
        %v604 = vmax.f32 %v602, 0.0
        %s605 = sld [smem:[#allocation13 + $0x3]]
        %v606 = vstv %s605
        %v607 = vmul.f32 %v562, %v606
        %v608 = vmul.f32 %v563, %v606
        %s609 = sld [smem:[#allocation14 + $0x3]]
        %v610 = vstv %s609
        %v611 = vadd.f32 %v607, %v610
        %v612 = vadd.f32 %v608, %v610
        %v613 = vmax.f32 %v611, 0.0
        %v614 = vmax.f32 %v612, 0.0
        %v615 = vld [vmem:[#allocation2] sm:$0xff]
        %v616 = vld [vmem:[#allocation2 + $0x8] sm:$0xff]
        %v617 = vld [vmem:[#allocation2 + $0x10] sm:$0x3]
        %s618 = sld [smem:[#allocation10]]
        %v619 = vstv %s618
        %v620 = vmul.f32 %v615, %v619
        %v621 = vmul.f32 %v616, %v619
        %s622 = sld [smem:[#allocation10 + $0x80]]
        %v623 = vstv %s622
        %v624 = vmul.f32 %v615, %v623
        %v625 = vmul.f32 %v616, %v623
        %628 = vrot.lane.b32.xlu0 %v624, 127
        %v629 = vpop.permute.xlu0 %628
        %630 = vrot.lane.b32.xlu0 %v625, 127
        %v631 = vpop.permute.xlu0 %630
        %v634 = vadd.f32 %v620, %v629
        %v635 = vadd.f32 %v621, %v631
        %s636 = sld [smem:[#allocation10 + $0x100]]
        %v637 = vstv %s636
        %v638 = vmul.f32 %v615, %v637
        %v639 = vmul.f32 %v616, %v637
        %642 = vrot.lane.b32.xlu0 %v638, 126
        %v643 = vpop.permute.xlu0 %642
        %644 = vrot.lane.b32.xlu0 %v639, 126
        %v645 = vpop.permute.xlu0 %644
        %v648 = vadd.f32 %v634, %v643
        %v649 = vadd.f32 %v635, %v645
        %s650 = sld [smem:[#allocation10 + $0x180]]
        %v651 = vstv %s650
        %v652 = vmul.f32 %v615, %v651
        %v653 = vmul.f32 %v616, %v651
        %v654 = vmul.f32 %v617, %v651
        %vm658 = vcmask 1046528
        %v659 = vrot.slane %v652, 1
        %v660 = vrot.slane %v653, 1
        %v661 = vsel %vm658, %v659, %v660
        %v662 = vrot.slane %v654, 1
        %v663 = vsel %vm658, %v660, %v662
        %v666 = vadd.f32 %v648, %v661
        %v667 = vadd.f32 %v649, %v663
        %s668 = sld [smem:[#allocation10 + $0x200]]
        %v669 = vstv %s668
        %v670 = vmul.f32 %v615, %v669
        %v671 = vmul.f32 %v616, %v669
        %v672 = vmul.f32 %v617, %v669
        %v676 = vrot.slane %v670, 1
        %v677 = vrot.slane %v671, 1
        %v678 = vsel %vm658, %v676, %v677
        %v679 = vrot.slane %v672, 1
        %v680 = vsel %vm658, %v677, %v679
        %681 = vrot.lane.b32.xlu0 %v678, 127
        %v682 = vpop.permute.xlu0 %681
        %683 = vrot.lane.b32.xlu0 %v680, 127
        %v684 = vpop.permute.xlu0 %683
        %v687 = vadd.f32 %v666, %v682
        %v688 = vadd.f32 %v667, %v684
        %s689 = sld [smem:[#allocation10 + $0x280]]
        %v690 = vstv %s689
        %v691 = vmul.f32 %v615, %v690
        %v692 = vmul.f32 %v616, %v690
        %v693 = vmul.f32 %v617, %v690
        %v697 = vrot.slane %v691, 1
        %v698 = vrot.slane %v692, 1
        %v699 = vsel %vm658, %v697, %v698
        %v700 = vrot.slane %v693, 1
        %v701 = vsel %vm658, %v698, %v700
        %702 = vrot.lane.b32.xlu0 %v699, 126
        %v703 = vpop.permute.xlu0 %702
        %704 = vrot.lane.b32.xlu0 %v701, 126
        %v705 = vpop.permute.xlu0 %704
        %v708 = vadd.f32 %v687, %v703
        %v709 = vadd.f32 %v688, %v705
        %s710 = sld [smem:[#allocation10 + $0x300]]
        %v711 = vstv %s710
        %v712 = vmul.f32 %v615, %v711
        %v713 = vmul.f32 %v616, %v711
        %v714 = vmul.f32 %v617, %v711
        %vm718 = vcmask 1045504
        %v719 = vrot.slane %v712, 2
        %v720 = vrot.slane %v713, 2
        %v721 = vsel %vm718, %v719, %v720
        %v722 = vrot.slane %v714, 2
        %v723 = vsel %vm718, %v720, %v722
        %v726 = vadd.f32 %v708, %v721
        %v727 = vadd.f32 %v709, %v723
        %s728 = sld [smem:[#allocation10 + $0x380]]
        %v729 = vstv %s728
        %v730 = vmul.f32 %v615, %v729
        %v731 = vmul.f32 %v616, %v729
        %v732 = vmul.f32 %v617, %v729
        %v736 = vrot.slane %v730, 2
        %v737 = vrot.slane %v731, 2
        %v738 = vsel %vm718, %v736, %v737
        %v739 = vrot.slane %v732, 2
        %v740 = vsel %vm718, %v737, %v739
        %741 = vrot.lane.b32.xlu0 %v738, 127
        %v742 = vpop.permute.xlu0 %741
        %743 = vrot.lane.b32.xlu0 %v740, 127
        %v744 = vpop.permute.xlu0 %743
        %v747 = vadd.f32 %v726, %v742
        %v748 = vadd.f32 %v727, %v744
        %s749 = sld [smem:[#allocation10 + $0x400]]
        %v750 = vstv %s749
        %v751 = vmul.f32 %v615, %v750
        %v752 = vmul.f32 %v616, %v750
        %v753 = vmul.f32 %v617, %v750
        %v757 = vrot.slane %v751, 2
        %v758 = vrot.slane %v752, 2
        %v759 = vsel %vm718, %v757, %v758
        %v760 = vrot.slane %v753, 2
        %v761 = vsel %vm718, %v758, %v760
        %762 = vrot.lane.b32.xlu0 %v759, 126
        %v763 = vpop.permute.xlu0 %762
        %764 = vrot.lane.b32.xlu0 %v761, 126
        %v765 = vpop.permute.xlu0 %764
        %v768 = vadd.f32 %v747, %v763
        %v769 = vadd.f32 %v748, %v765
        %s770 = sld [smem:[#allocation11]]
        %v771 = vstv %s770
        %v772 = vadd.f32 %v768, %v771
        %v773 = vadd.f32 %v769, %v771
        %v774 = vmax.f32 %v772, 0.0
        %v775 = vmax.f32 %v773, 0.0
        %v776 = vld [vmem:[%s482] sm:$0xff]
        %v777 = vld [vmem:[%s482 + $0x8] sm:$0xff]
        %v778 = vld [vmem:[%s482 + $0x10] sm:$0x3]
        %s779 = sld [smem:[#allocation10 + $0x1]]
        %v780 = vstv %s779
        %v781 = vmul.f32 %v776, %v780
        %v782 = vmul.f32 %v777, %v780
        %s783 = sld [smem:[#allocation10 + $0x81]]
        %v784 = vstv %s783
        %v785 = vmul.f32 %v776, %v784
        %v786 = vmul.f32 %v777, %v784
        %789 = vrot.lane.b32.xlu0 %v785, 127
        %v790 = vpop.permute.xlu0 %789
        %791 = vrot.lane.b32.xlu0 %v786, 127
        %v792 = vpop.permute.xlu0 %791
        %v795 = vadd.f32 %v781, %v790
        %v796 = vadd.f32 %v782, %v792
        %s797 = sld [smem:[#allocation10 + $0x101]]
        %v798 = vstv %s797
        %v799 = vmul.f32 %v776, %v798
        %v800 = vmul.f32 %v777, %v798
        %803 = vrot.lane.b32.xlu0 %v799, 126
        %v804 = vpop.permute.xlu0 %803
        %805 = vrot.lane.b32.xlu0 %v800, 126
        %v806 = vpop.permute.xlu0 %805
        %v809 = vadd.f32 %v795, %v804
        %v810 = vadd.f32 %v796, %v806
        %s811 = sld [smem:[#allocation10 + $0x181]]
        %v812 = vstv %s811
        %v813 = vmul.f32 %v776, %v812
        %v814 = vmul.f32 %v777, %v812
        %v815 = vmul.f32 %v778, %v812
        %v819 = vrot.slane %v813, 1
        %v820 = vrot.slane %v814, 1
        %v821 = vsel %vm658, %v819, %v820
        %v822 = vrot.slane %v815, 1
        %v823 = vsel %vm658, %v820, %v822
        %v826 = vadd.f32 %v809, %v821
        %v827 = vadd.f32 %v810, %v823
        %s828 = sld [smem:[#allocation10 + $0x201]]
        %v829 = vstv %s828
        %v830 = vmul.f32 %v776, %v829
        %v831 = vmul.f32 %v777, %v829
        %v832 = vmul.f32 %v778, %v829
        %v836 = vrot.slane %v830, 1
        %v837 = vrot.slane %v831, 1
        %v838 = vsel %vm658, %v836, %v837
        %v839 = vrot.slane %v832, 1
        %v840 = vsel %vm658, %v837, %v839
        %841 = vrot.lane.b32.xlu0 %v838, 127
        %v842 = vpop.permute.xlu0 %841
        %843 = vrot.lane.b32.xlu0 %v840, 127
        %v844 = vpop.permute.xlu0 %843
        %v847 = vadd.f32 %v826, %v842
        %v848 = vadd.f32 %v827, %v844
        %s849 = sld [smem:[#allocation10 + $0x281]]
        %v850 = vstv %s849
        %v851 = vmul.f32 %v776, %v850
        %v852 = vmul.f32 %v777, %v850
        %v853 = vmul.f32 %v778, %v850
        %v857 = vrot.slane %v851, 1
        %v858 = vrot.slane %v852, 1
        %v859 = vsel %vm658, %v857, %v858
        %v860 = vrot.slane %v853, 1
        %v861 = vsel %vm658, %v858, %v860
        %862 = vrot.lane.b32.xlu0 %v859, 126
        %v863 = vpop.permute.xlu0 %862
        %864 = vrot.lane.b32.xlu0 %v861, 126
        %v865 = vpop.permute.xlu0 %864
        %v868 = vadd.f32 %v847, %v863
        %v869 = vadd.f32 %v848, %v865
        %s870 = sld [smem:[#allocation10 + $0x301]]
        %v871 = vstv %s870
        %v872 = vmul.f32 %v776, %v871
        %v873 = vmul.f32 %v777, %v871
        %v874 = vmul.f32 %v778, %v871
        %v878 = vrot.slane %v872, 2
        %v879 = vrot.slane %v873, 2
        %v880 = vsel %vm718, %v878, %v879
        %v881 = vrot.slane %v874, 2
        %v882 = vsel %vm718, %v879, %v881
        %v885 = vadd.f32 %v868, %v880
        %v886 = vadd.f32 %v869, %v882
        %s887 = sld [smem:[#allocation10 + $0x381]]
        %v888 = vstv %s887
        %v889 = vmul.f32 %v776, %v888
        %v890 = vmul.f32 %v777, %v888
        %v891 = vmul.f32 %v778, %v888
        %v895 = vrot.slane %v889, 2
        %v896 = vrot.slane %v890, 2
        %v897 = vsel %vm718, %v895, %v896
        %v898 = vrot.slane %v891, 2
        %v899 = vsel %vm718, %v896, %v898
        %900 = vrot.lane.b32.xlu0 %v897, 127
        %v901 = vpop.permute.xlu0 %900
        %902 = vrot.lane.b32.xlu0 %v899, 127
        %v903 = vpop.permute.xlu0 %902
        %v906 = vadd.f32 %v885, %v901
        %v907 = vadd.f32 %v886, %v903
        %s908 = sld [smem:[#allocation10 + $0x401]]
        %v909 = vstv %s908
        %v910 = vmul.f32 %v776, %v909
        %v911 = vmul.f32 %v777, %v909
        %v912 = vmul.f32 %v778, %v909
        %v916 = vrot.slane %v910, 2
        %v917 = vrot.slane %v911, 2
        %v918 = vsel %vm718, %v916, %v917
        %v919 = vrot.slane %v912, 2
        %v920 = vsel %vm718, %v917, %v919
        %921 = vrot.lane.b32.xlu0 %v918, 126
        %v922 = vpop.permute.xlu0 %921
        %923 = vrot.lane.b32.xlu0 %v920, 126
        %v924 = vpop.permute.xlu0 %923
        %v927 = vadd.f32 %v906, %v922
        %v928 = vadd.f32 %v907, %v924
        %s929 = sld [smem:[#allocation11 + $0x1]]
        %v930 = vstv %s929
        %v931 = vadd.f32 %v927, %v930
        %v932 = vadd.f32 %v928, %v930
        %v933 = vmax.f32 %v931, 0.0
        %v934 = vmax.f32 %v932, 0.0
        %v935 = vld [vmem:[%s527] sm:$0xff]
        %v936 = vld [vmem:[%s527 + $0x8] sm:$0xff]
        %v937 = vld [vmem:[%s527 + $0x10] sm:$0x3]
        %s938 = sld [smem:[#allocation10 + $0x2]]
        %v939 = vstv %s938
        %v940 = vmul.f32 %v935, %v939
        %v941 = vmul.f32 %v936, %v939
        %s942 = sld [smem:[#allocation10 + $0x82]]
        %v943 = vstv %s942
        %v944 = vmul.f32 %v935, %v943
        %v945 = vmul.f32 %v936, %v943
        %948 = vrot.lane.b32.xlu0 %v944, 127
        %v949 = vpop.permute.xlu0 %948
        %950 = vrot.lane.b32.xlu0 %v945, 127
        %v951 = vpop.permute.xlu0 %950
        %v954 = vadd.f32 %v940, %v949
        %v955 = vadd.f32 %v941, %v951
        %s956 = sld [smem:[#allocation10 + $0x102]]
        %v957 = vstv %s956
        %v958 = vmul.f32 %v935, %v957
        %v959 = vmul.f32 %v936, %v957
        %962 = vrot.lane.b32.xlu0 %v958, 126
        %v963 = vpop.permute.xlu0 %962
        %964 = vrot.lane.b32.xlu0 %v959, 126
        %v965 = vpop.permute.xlu0 %964
        %v968 = vadd.f32 %v954, %v963
        %v969 = vadd.f32 %v955, %v965
        %s970 = sld [smem:[#allocation10 + $0x182]]
        %v971 = vstv %s970
        %v972 = vmul.f32 %v935, %v971
        %v973 = vmul.f32 %v936, %v971
        %v974 = vmul.f32 %v937, %v971
        %v978 = vrot.slane %v972, 1
        %v979 = vrot.slane %v973, 1
        %v980 = vsel %vm658, %v978, %v979
        %v981 = vrot.slane %v974, 1
        %v982 = vsel %vm658, %v979, %v981
        %v985 = vadd.f32 %v968, %v980
        %v986 = vadd.f32 %v969, %v982
        %s987 = sld [smem:[#allocation10 + $0x202]]
        %v988 = vstv %s987
        %v989 = vmul.f32 %v935, %v988
        %v990 = vmul.f32 %v936, %v988
        %v991 = vmul.f32 %v937, %v988
        %v995 = vrot.slane %v989, 1
        %v996 = vrot.slane %v990, 1
        %v997 = vsel %vm658, %v995, %v996
        %v998 = vrot.slane %v991, 1
        %v999 = vsel %vm658, %v996, %v998
        %1000 = vrot.lane.b32.xlu0 %v997, 127
        %v1001 = vpop.permute.xlu0 %1000
        %1002 = vrot.lane.b32.xlu0 %v999, 127
        %v1003 = vpop.permute.xlu0 %1002
        %v1006 = vadd.f32 %v985, %v1001
        %v1007 = vadd.f32 %v986, %v1003
        %s1008 = sld [smem:[#allocation10 + $0x282]]
        %v1009 = vstv %s1008
        %v1010 = vmul.f32 %v935, %v1009
        %v1011 = vmul.f32 %v936, %v1009
        %v1012 = vmul.f32 %v937, %v1009
        %v1016 = vrot.slane %v1010, 1
        %v1017 = vrot.slane %v1011, 1
        %v1018 = vsel %vm658, %v1016, %v1017
        %v1019 = vrot.slane %v1012, 1
        %v1020 = vsel %vm658, %v1017, %v1019
        %1021 = vrot.lane.b32.xlu0 %v1018, 126
        %v1022 = vpop.permute.xlu0 %1021
        %1023 = vrot.lane.b32.xlu0 %v1020, 126
        %v1024 = vpop.permute.xlu0 %1023
        %v1027 = vadd.f32 %v1006, %v1022
        %v1028 = vadd.f32 %v1007, %v1024
        %s1029 = sld [smem:[#allocation10 + $0x302]]
        %v1030 = vstv %s1029
        %v1031 = vmul.f32 %v935, %v1030
        %v1032 = vmul.f32 %v936, %v1030
        %v1033 = vmul.f32 %v937, %v1030
        %v1037 = vrot.slane %v1031, 2
        %v1038 = vrot.slane %v1032, 2
        %v1039 = vsel %vm718, %v1037, %v1038
        %v1040 = vrot.slane %v1033, 2
        %v1041 = vsel %vm718, %v1038, %v1040
        %v1044 = vadd.f32 %v1027, %v1039
        %v1045 = vadd.f32 %v1028, %v1041
        %s1046 = sld [smem:[#allocation10 + $0x382]]
        %v1047 = vstv %s1046
        %v1048 = vmul.f32 %v935, %v1047
        %v1049 = vmul.f32 %v936, %v1047
        %v1050 = vmul.f32 %v937, %v1047
        %v1054 = vrot.slane %v1048, 2
        %v1055 = vrot.slane %v1049, 2
        %v1056 = vsel %vm718, %v1054, %v1055
        %v1057 = vrot.slane %v1050, 2
        %v1058 = vsel %vm718, %v1055, %v1057
        %1059 = vrot.lane.b32.xlu0 %v1056, 127
        %v1060 = vpop.permute.xlu0 %1059
        %1061 = vrot.lane.b32.xlu0 %v1058, 127
        %v1062 = vpop.permute.xlu0 %1061
        %v1065 = vadd.f32 %v1044, %v1060
        %v1066 = vadd.f32 %v1045, %v1062
        %s1067 = sld [smem:[#allocation10 + $0x402]]
        %v1068 = vstv %s1067
        %v1069 = vmul.f32 %v935, %v1068
        %v1070 = vmul.f32 %v936, %v1068
        %v1071 = vmul.f32 %v937, %v1068
        %v1075 = vrot.slane %v1069, 2
        %v1076 = vrot.slane %v1070, 2
        %v1077 = vsel %vm718, %v1075, %v1076
        %v1078 = vrot.slane %v1071, 2
        %v1079 = vsel %vm718, %v1076, %v1078
        %1080 = vrot.lane.b32.xlu0 %v1077, 126
        %v1081 = vpop.permute.xlu0 %1080
        %1082 = vrot.lane.b32.xlu0 %v1079, 126
        %v1083 = vpop.permute.xlu0 %1082
        %v1086 = vadd.f32 %v1065, %v1081
        %v1087 = vadd.f32 %v1066, %v1083
        %s1088 = sld [smem:[#allocation11 + $0x2]]
        %v1089 = vstv %s1088
        %v1090 = vadd.f32 %v1086, %v1089
        %v1091 = vadd.f32 %v1087, %v1089
        %v1092 = vmax.f32 %v1090, 0.0
        %v1093 = vmax.f32 %v1091, 0.0
        %v1094 = vld [vmem:[%s572] sm:$0xff]
        %v1095 = vld [vmem:[%s572 + $0x8] sm:$0xff]
        %v1096 = vld [vmem:[%s572 + $0x10] sm:$0x3]
        %s1097 = sld [smem:[#allocation10 + $0x3]]
        %v1098 = vstv %s1097
        %v1099 = vmul.f32 %v1094, %v1098
        %v1100 = vmul.f32 %v1095, %v1098
        %s1101 = sld [smem:[#allocation10 + $0x83]]
        %v1102 = vstv %s1101
        %v1103 = vmul.f32 %v1094, %v1102
        %v1104 = vmul.f32 %v1095, %v1102
        %1107 = vrot.lane.b32.xlu0 %v1103, 127
        %v1108 = vpop.permute.xlu0 %1107
        %1109 = vrot.lane.b32.xlu0 %v1104, 127
        %v1110 = vpop.permute.xlu0 %1109
        %v1113 = vadd.f32 %v1099, %v1108
        %v1114 = vadd.f32 %v1100, %v1110
        %s1115 = sld [smem:[#allocation10 + $0x103]]
        %v1116 = vstv %s1115
        %v1117 = vmul.f32 %v1094, %v1116
        %v1118 = vmul.f32 %v1095, %v1116
        %1121 = vrot.lane.b32.xlu0 %v1117, 126
        %v1122 = vpop.permute.xlu0 %1121
        %1123 = vrot.lane.b32.xlu0 %v1118, 126
        %v1124 = vpop.permute.xlu0 %1123
        %v1127 = vadd.f32 %v1113, %v1122
        %v1128 = vadd.f32 %v1114, %v1124
        %s1129 = sld [smem:[#allocation10 + $0x183]]
        %v1130 = vstv %s1129
        %v1131 = vmul.f32 %v1094, %v1130
        %v1132 = vmul.f32 %v1095, %v1130
        %v1133 = vmul.f32 %v1096, %v1130
        %v1137 = vrot.slane %v1131, 1
        %v1138 = vrot.slane %v1132, 1
        %v1139 = vsel %vm658, %v1137, %v1138
        %v1140 = vrot.slane %v1133, 1
        %v1141 = vsel %vm658, %v1138, %v1140
        %v1144 = vadd.f32 %v1127, %v1139
        %v1145 = vadd.f32 %v1128, %v1141
        %s1146 = sld [smem:[#allocation10 + $0x203]]
        %v1147 = vstv %s1146
        %v1148 = vmul.f32 %v1094, %v1147
        %v1149 = vmul.f32 %v1095, %v1147
        %v1150 = vmul.f32 %v1096, %v1147
        %v1154 = vrot.slane %v1148, 1
        %v1155 = vrot.slane %v1149, 1
        %v1156 = vsel %vm658, %v1154, %v1155
        %v1157 = vrot.slane %v1150, 1
        %v1158 = vsel %vm658, %v1155, %v1157
        %1159 = vrot.lane.b32.xlu0 %v1156, 127
        %v1160 = vpop.permute.xlu0 %1159
        %1161 = vrot.lane.b32.xlu0 %v1158, 127
        %v1162 = vpop.permute.xlu0 %1161
        %v1165 = vadd.f32 %v1144, %v1160
        %v1166 = vadd.f32 %v1145, %v1162
        %s1167 = sld [smem:[#allocation10 + $0x283]]
        %v1168 = vstv %s1167
        %v1169 = vmul.f32 %v1094, %v1168
        %v1170 = vmul.f32 %v1095, %v1168
        %v1171 = vmul.f32 %v1096, %v1168
        %v1175 = vrot.slane %v1169, 1
        %v1176 = vrot.slane %v1170, 1
        %v1177 = vsel %vm658, %v1175, %v1176
        %v1178 = vrot.slane %v1171, 1
        %v1179 = vsel %vm658, %v1176, %v1178
        %1180 = vrot.lane.b32.xlu0 %v1177, 126
        %v1181 = vpop.permute.xlu0 %1180
        %1182 = vrot.lane.b32.xlu0 %v1179, 126
        %v1183 = vpop.permute.xlu0 %1182
        %v1186 = vadd.f32 %v1165, %v1181
        %v1187 = vadd.f32 %v1166, %v1183
        %s1188 = sld [smem:[#allocation10 + $0x303]]
        %v1189 = vstv %s1188
        %v1190 = vmul.f32 %v1094, %v1189
        %v1191 = vmul.f32 %v1095, %v1189
        %v1192 = vmul.f32 %v1096, %v1189
        %v1196 = vrot.slane %v1190, 2
        %v1197 = vrot.slane %v1191, 2
        %v1198 = vsel %vm718, %v1196, %v1197
        %v1199 = vrot.slane %v1192, 2
        %v1200 = vsel %vm718, %v1197, %v1199
        %v1203 = vadd.f32 %v1186, %v1198
        %v1204 = vadd.f32 %v1187, %v1200
        %s1205 = sld [smem:[#allocation10 + $0x383]]
        %v1206 = vstv %s1205
        %v1207 = vmul.f32 %v1094, %v1206
        %v1208 = vmul.f32 %v1095, %v1206
        %v1209 = vmul.f32 %v1096, %v1206
        %v1213 = vrot.slane %v1207, 2
        %v1214 = vrot.slane %v1208, 2
        %v1215 = vsel %vm718, %v1213, %v1214
        %v1216 = vrot.slane %v1209, 2
        %v1217 = vsel %vm718, %v1214, %v1216
        %1218 = vrot.lane.b32.xlu0 %v1215, 127
        %v1219 = vpop.permute.xlu0 %1218
        %1220 = vrot.lane.b32.xlu0 %v1217, 127
        %v1221 = vpop.permute.xlu0 %1220
        %v1224 = vadd.f32 %v1203, %v1219
        %v1225 = vadd.f32 %v1204, %v1221
        %s1226 = sld [smem:[#allocation10 + $0x403]]
        %v1227 = vstv %s1226
        %v1228 = vmul.f32 %v1094, %v1227
        %v1229 = vmul.f32 %v1095, %v1227
        %v1230 = vmul.f32 %v1096, %v1227
        %v1234 = vrot.slane %v1228, 2
        %v1235 = vrot.slane %v1229, 2
        %v1236 = vsel %vm718, %v1234, %v1235
        %v1237 = vrot.slane %v1230, 2
        %v1238 = vsel %vm718, %v1235, %v1237
        %1239 = vrot.lane.b32.xlu0 %v1236, 126
        %v1240 = vpop.permute.xlu0 %1239
        %1241 = vrot.lane.b32.xlu0 %v1238, 126
        %v1242 = vpop.permute.xlu0 %1241
        %v1245 = vadd.f32 %v1224, %v1240
        %v1246 = vadd.f32 %v1225, %v1242
        %s1247 = sld [smem:[#allocation11 + $0x3]]
        %v1248 = vstv %s1247
        %v1249 = vadd.f32 %v1245, %v1248
        %v1250 = vadd.f32 %v1246, %v1248
        %v1251 = vmax.f32 %v1249, 0.0
        %v1252 = vmax.f32 %v1250, 0.0
        %1255 = vrot.lane.b32.xlu0 %v593, 16
        %v1256 = vpop.permute.xlu0 %1255
        %1257 = vrot.lane.b32.xlu0 %v594, 16
        %v1258 = vpop.permute.xlu0 %1257
        %1263 = vrot.lane.b32.xlu0 %v603, 32
        %v1264 = vpop.permute.xlu0 %1263
        %1265 = vrot.lane.b32.xlu0 %v604, 32
        %v1266 = vpop.permute.xlu0 %1265
        %1271 = vrot.lane.b32.xlu0 %v613, 48
        %v1272 = vpop.permute.xlu0 %1271
        %1273 = vrot.lane.b32.xlu0 %v614, 48
        %v1274 = vpop.permute.xlu0 %1273
        %1279 = vrot.lane.b32.xlu0 %v774, 64
        %v1280 = vpop.permute.xlu0 %1279
        %1281 = vrot.lane.b32.xlu0 %v775, 64
        %v1282 = vpop.permute.xlu0 %1281
        %1287 = vrot.lane.b32.xlu0 %v933, 80
        %v1288 = vpop.permute.xlu0 %1287
        %1289 = vrot.lane.b32.xlu0 %v934, 80
        %v1290 = vpop.permute.xlu0 %1289
        %1295 = vrot.lane.b32.xlu0 %v1092, 96
        %v1296 = vpop.permute.xlu0 %1295
        %1297 = vrot.lane.b32.xlu0 %v1093, 96
        %v1298 = vpop.permute.xlu0 %1297
        %1303 = vrot.lane.b32.xlu0 %v1251, 112
        %v1304 = vpop.permute.xlu0 %1303
        %1305 = vrot.lane.b32.xlu0 %v1252, 112
        %v1306 = vpop.permute.xlu0 %1305
        %vm1309 = vcmask 130048
        %v1310 = vsel %vm1309, %v583, %v1256
        %v1311 = vsel %vm1309, %v584, %v1258
        %vm1312 = vcmask 261120
        %v1313 = vsel %vm1312, %v1310, %v1264
        %v1314 = vsel %vm1312, %v1311, %v1266
        %vm1315 = vcmask 392192
        %v1316 = vsel %vm1315, %v1313, %v1272
        %v1317 = vsel %vm1315, %v1314, %v1274
        %vm1318 = vcmask 523264
        %v1319 = vsel %vm1318, %v1316, %v1280
        %v1320 = vsel %vm1318, %v1317, %v1282
        %vm1321 = vcmask 654336
        %v1322 = vsel %vm1321, %v1319, %v1288
        %v1323 = vsel %vm1321, %v1320, %v1290
        %vm1324 = vcmask 785408
        %v1325 = vsel %vm1324, %v1322, %v1296
        %v1326 = vsel %vm1324, %v1323, %v1298
        %vm1327 = vcmask 916480
        %v1328 = vsel %vm1327, %v1325, %v1304
        %v1329 = vsel %vm1327, %v1326, %v1306
        %1330 = vst [vmem:[%s377] sm:$0xff] %v1328
        %1331 = vst [vmem:[%s377 + $0x8] sm:$0xff] %v1329
        %s1332 = sand.u32 %s188, 1
        %s1333 = scalar_lea.sflag [#allocation5], %s1332
        %s1334 = sand.u32 %s188, 1
        %s1335 = smul.addr %s1334, 16
        %s1336 = scalar_lea.vmem [#allocation16], %s1335
        // Predicated region
        $region77: #{tpu_custom_call.1} parent=47 // pred_check
          %p1337 = pneg %p198
        $region78: #{tpu_custom_call.1} parent=47 // pred_check_branch
          %1339 = sbr.rel (%p1337) target = $region80
        $region79: #{tpu_custom_call.1} parent=47 // pred_region
          %1341 = vsyncadd %s1333, 0
          %s1342 = smul.addr %s28, 2
          %s1343 = smul.addr %s1342, 8
          %s1344 = scalar_lea.hbm %s7, %s1343
          %s1345 = sshll.u32 %s1336, 4
          %s1346 = int_to_ptr.vmem [resolvable:$true] %s1345
          %s1347 = sshll.u32 %s1344, 4
          %s1348 = int_to_ptr.hbm [resolvable:$true] %s1347
          %1353 = dma.vmem_to_hbm [thread:$0]  %s1346, 256, %s1348, %s1333, 128, 128, 8
        $region80: #{tpu_custom_call.1} parent=47 // pred_fallthru
          _
      $region48: #{tpu_custom_call.1} parent=5 // pred_fallthru
        _
      %p1354 = scmp.le.s32.totalorder 2, %s23
      // Predicated region
      $region81: #{tpu_custom_call.1} parent=5 // pred_check
        %p1355 = pneg %p1354
      $region82: #{tpu_custom_call.1} parent=5 // pred_check_branch
        %1357 = sbr.rel (%p1355) target = $region84
      $region83: #{tpu_custom_call.1} parent=5 // pred_region
        %s1358 = ssub.s32 %s23, 2
        // Predicated region
        $region85: #{tpu_custom_call.1} parent=83 // pred_check
          %p1359 = pneg %p204
        $region86: #{tpu_custom_call.1} parent=83 // pred_check_branch
          %1361 = sbr.rel (%p1359) target = $region88
        $region87: #{tpu_custom_call.1} parent=83 // pred_region
          %s1362 = sand.u32 %s189, 1
          %s1363 = scalar_lea.sflag [#allocation5], %s1362
          %s1364 = sand.u32 %s189, 1
          %s1365 = smul.addr %s1364, 16
          %s1366 = scalar_lea.vmem [#allocation16], %s1365
          %1368 = dma.done %s1363, 256
        $region88: #{tpu_custom_call.1} parent=83 // pred_fallthru
          _
      $region84: #{tpu_custom_call.1} parent=5 // pred_fallthru
        _
    $region6: #{tpu_custom_call.1} parent=1 // loop_footer
      %s27 = sadd.s32 1, %s23
    $region7: #{tpu_custom_call.1} parent=1 // loop_footer_branch
      %22 = sbr.rel target = $region3
    $region8: #{tpu_custom_call.1} parent=1 // loop_exit
      _
    %1369 = vsyncpa [#allocation4], 1
    %s1370 = scalar_lea.sflag [#allocation4], 1
    %1371 = vsyncpa %s1370, 1
    %1372 = vsyncpa [#allocation5], 1
    %s1373 = scalar_lea.sflag [#allocation5], 1
    %1374 = vsyncpa %s1373, 1
    %1375 = vsyncpa [#allocation6], 1
    %s1376 = scalar_lea.sflag [#allocation6], 1
    %1377 = vsyncpa %s1376, 1
    %1378 = vsyncpa [#allocation9], 1
    %1379 = vsyncpa [#allocation12], 1
    %1380 = vsyncpa [#allocation15], 1

</llo_original>
